<compile_context>
chip_gen: v5e
topology: v5e:2x2
jax: 0.10.0
libtpu: 0.0.40
codegen_flags: <defaults>
</compile_context>

<pallas_src>
import jax
import jax.numpy as jnp
from jax import lax
from jax.experimental import pallas as pl
from jax.experimental.pallas import tpu as pltpu


def _round_up(x, m):
    return (x + m - 1) // m * m


def rnn_kernel(tok_ref, embproj_ref, h0_ref, whh_ref, wout_ref, bout_ref,
               logits_ref, hT_ref, hs_ref):
    """Single-invocation CharRNN forward.

    tok_ref     : SMEM (S, Bp) int32   token ids (scalar-prefetched)
    embproj_ref : VMEM (VOCABp, Hp)    emb @ W_ih^T + b_ih + b_hh  (folded table)
    h0_ref      : VMEM (Bp, Hp)        initial hidden state (padded)
    whh_ref     : VMEM (Hp, Hp)        W_hh^T (padded)
    wout_ref    : VMEM (Hp, Vp)        W_out^T (padded)
    bout_ref    : VMEM (1, Vp)         b_out (padded)
    logits_ref  : out  (S*Bp, Vp)      logits, time-major rows (padded)
    hT_ref      : out  (Bp, Hp)        final hidden state (padded)
    hs_ref      : VMEM scratch (S*Bp, Hp): gathered pre-activations, overwritten
                  in place with the hidden states (single merged buffer).
    """
    sbp = hs_ref.shape[0]
    bp = h0_ref.shape[0]
    seq_len = sbp // bp

    whh = whh_ref[...]   # W_hh^T stays resident in vregs across the recurrence

    def step(t, h):
        row = pl.multiple_of(t * bp, bp)                 # sublane-aligned block
        # In-kernel gather from the folded table: one (1, Hp) dynamic row read
        # per (t, b) token id held in SMEM; rows land directly in hs_ref.
        for b in range(bp):                              # static, tiny (bp == 8)
            hs_ref[pl.ds(row + b, 1), :] = (
                embproj_ref[pl.ds(tok_ref[t, b], 1), :])
        pre = hs_ref[pl.ds(row, bp), :] + jnp.dot(
            h, whh, preferred_element_type=jnp.float32)
        h_new = jnp.tanh(pre)
        hs_ref[pl.ds(row, bp), :] = h_new                # reuse the same rows
        return h_new

    h_final = lax.fori_loop(0, seq_len, step, h0_ref[...],
                            unroll=min(seq_len, 8))

    hT_ref[...] = h_final                                # written exactly once

    # Hoisted output projection: one big lane-dense matmul + dense store.
    logits_ref[...] = (
        jnp.dot(hs_ref[...], wout_ref[...], preferred_element_type=jnp.float32)
        + bout_ref[...])


def prepare_kernel_params(params):
    """One-time (cacheable) padding + folding of parameters for the kernel."""
    emb, w_ih_t, w_hh_t, b_ih, b_hh, w_out_t, b_out = params
    vocab, E = emb.shape
    H = w_hh_t.shape[0]
    V = w_out_t.shape[1]

    Hp = _round_up(H, 128)
    Vp = _round_up(V, 128)
    VOCABp = _round_up(max(vocab, 8), 8)

    f32 = jnp.float32
    # Fold embedding + input projection + both RNN biases into one table.
    emb_proj = emb @ w_ih_t + b_ih + b_hh                       # [vocab, H]
    embproj_p = jnp.zeros((VOCABp, Hp), f32).at[:vocab, :H].set(emb_proj)
    whh_p = jnp.zeros((Hp, Hp), f32).at[:H, :H].set(w_hh_t)
    wout_p = jnp.zeros((Hp, Vp), f32).at[:H, :V].set(w_out_t)
    bout_p = jnp.zeros((1, Vp), f32).at[:, :V].set(b_out)
    dims = dict(H=H, V=V, Hp=Hp, Vp=Vp)
    return (embproj_p, whh_p, wout_p, bout_p, dims)


def char_rnn_forward(input_seq, h0, kparams):
    """input_seq: [S, B] int32; h0: [1, B, H].  Returns (logits [S,B,V], hT [1,B,H])."""
    embproj_p, whh_p, wout_p, bout_p, dims = kparams
    H, V, Hp, Vp = dims["H"], dims["V"], dims["Hp"], dims["Vp"]
    S, B = input_seq.shape
    Bp = _round_up(max(B, 8), 8)
    VOCABp = embproj_p.shape[0]
    f32 = jnp.float32

    # Per-call glue is only the (tiny) token / h0 padding and output slicing.
    # Padded batch columns hold token 0; their rows are garbage and sliced off.
    tok_p = jnp.zeros((S, Bp), jnp.int32).at[:, :B].set(input_seq)
    h0_p = jnp.zeros((Bp, Hp), f32).at[:B, :H].set(h0[0])

    grid_spec = pltpu.PrefetchScalarGridSpec(
        num_scalar_prefetch=1,                 # tok_p -> SMEM
        grid=(1,),
        in_specs=[
            pl.BlockSpec((VOCABp, Hp), lambda i, tok: (0, 0)),
            pl.BlockSpec((Bp, Hp), lambda i, tok: (0, 0)),
            pl.BlockSpec((Hp, Hp), lambda i, tok: (0, 0)),
            pl.BlockSpec((Hp, Vp), lambda i, tok: (0, 0)),
            pl.BlockSpec((1, Vp), lambda i, tok: (0, 0)),
        ],
        out_specs=[
            pl.BlockSpec((S * Bp, Vp), lambda i, tok: (0, 0)),
            pl.BlockSpec((Bp, Hp), lambda i, tok: (0, 0)),
        ],
        scratch_shapes=[pltpu.VMEM((S * Bp, Hp), f32)],
    )

    logits_p, hT_p = pl.pallas_call(
        rnn_kernel,
        out_shape=(
            jax.ShapeDtypeStruct((S * Bp, Vp), f32),   # logits (padded, lane-dense)
            jax.ShapeDtypeStruct((Bp, Hp), f32),       # final hidden (padded)
        ),
        grid_spec=grid_spec,
        compiler_params=pltpu.CompilerParams(
            dimension_semantics=("arbitrary",)),
    )(tok_p, embproj_p, h0_p, whh_p, wout_p, bout_p)

    logits = logits_p.reshape(S, Bp, Vp)[:, :B, :V]
    hT = hT_p[:B, :H][None]
    return logits, hT


def init_params(key, vocab_size, embedding_dim, hidden_dim):
    ks = jax.random.split(key, 7)
    scale = 0.1
    emb = scale * jax.random.normal(ks[0], (vocab_size, embedding_dim), jnp.float32)
    w_ih = scale * jax.random.normal(ks[1], (hidden_dim, embedding_dim), jnp.float32)
    w_hh = scale * jax.random.normal(ks[2], (hidden_dim, hidden_dim), jnp.float32)
    b_ih = scale * jax.random.normal(ks[3], (hidden_dim,), jnp.float32)
    b_hh = scale * jax.random.normal(ks[4], (hidden_dim,), jnp.float32)
    w_out = scale * jax.random.normal(ks[5], (vocab_size, hidden_dim), jnp.float32)
    b_out = scale * jax.random.normal(ks[6], (vocab_size,), jnp.float32)
    # Pre-transpose weights so everything is x @ W (MXU-friendly).
    return (emb,
            w_ih.T, w_hh.T,
            b_ih.reshape(1, hidden_dim), b_hh.reshape(1, hidden_dim),
            w_out.T, b_out.reshape(1, vocab_size))


def reference_forward(input_seq, h0, params):
    """Pure-JAX reference matching PyTorch nn.RNN(tanh, 1 layer) + nn.Linear."""
    emb, w_ih_t, w_hh_t, b_ih, b_hh, w_out_t, b_out = params
    x = jnp.take(emb, input_seq, axis=0)                 # [S, B, E]

    def step(h, x_t):
        h_new = jnp.tanh(x_t @ w_ih_t + b_ih + h @ w_hh_t + b_hh)
        return h_new, h_new @ w_out_t + b_out

    hT, logits = jax.lax.scan(step, h0[0], x)
    return logits, hT[None]


if __name__ == "__main__":
    vocab_size, embedding_dim, hidden_dim = 64, 32, 32
    seq_len, batch = 8, 4

    key = jax.random.PRNGKey(0)
    k_par, k_tok = jax.random.split(key)
    params = init_params(k_par, vocab_size, embedding_dim, hidden_dim)
    kparams = prepare_kernel_params(params)   # one-time padding/folding (cached)

    input_seq = jax.random.randint(k_tok, (seq_len, batch), 0, vocab_size, jnp.int32)
    h0 = jnp.zeros((1, batch, hidden_dim), jnp.float32)   # initial_hidden_states

    logits, hT = char_rnn_forward(input_seq, h0, kparams)
    logits = jax.block_until_ready(logits)
    hT = jax.block_until_ready(hT)

    ref_logits, ref_hT = reference_forward(input_seq, h0, params)
    assert logits.shape == (seq_len, batch, vocab_size)
    assert hT.shape == (1, batch, hidden_dim)
    assert jnp.allclose(logits, ref_logits, atol=1e-5, rtol=1e-5)
    assert jnp.allclose(hT, ref_hT, atol=1e-5, rtol=1e-5)

    # TODO(synk): predict_argmax / predict_proba are host-side autoregressive
    # sampling loops that just re-call forward(); not kernel work.
    print("KERNEL_OK")
</pallas_src>

<mosaic_0001>
module attributes {stable_mosaic.version = 11 : i64} {
  func.func @rnn_kernel(%arg0: i32, %arg1: memref<8x8xi32, #tpu.memory_space<smem>>, %arg2: memref<64x128xf32, #tpu.memory_space<vmem>>, %arg3: memref<8x128xf32, #tpu.memory_space<vmem>>, %arg4: memref<128x128xf32, #tpu.memory_space<vmem>>, %arg5: memref<128x128xf32, #tpu.memory_space<vmem>>, %arg6: memref<1x128xf32, #tpu.memory_space<vmem>>, %arg7: memref<64x128xf32, #tpu.memory_space<vmem>>, %arg8: memref<8x128xf32, #tpu.memory_space<vmem>>, %arg9: memref<64x128xf32, #tpu.memory_space<vmem>>) attributes {dimension_semantics = [#tpu.dimension_semantics<arbitrary>], iteration_bounds = array<i64: 1>, scalar_prefetch = 1 : i64, scratch_operands = 1 : i64, tpu.core_type = #tpu.core_type<tc>, window_params = [{pipeline_mode = #tpu.pipeline_mode<synchronous>, transform_indices = @transform_0, window_bounds = array<i64: 64, 128>}, {pipeline_mode = #tpu.pipeline_mode<synchronous>, transform_indices = @transform_1, window_bounds = array<i64: 8, 128>}, {pipeline_mode = #tpu.pipeline_mode<synchronous>, transform_indices = @transform_2, window_bounds = array<i64: 128, 128>}, {pipeline_mode = #tpu.pipeline_mode<synchronous>, transform_indices = @transform_3, window_bounds = array<i64: 128, 128>}, {pipeline_mode = #tpu.pipeline_mode<synchronous>, transform_indices = @transform_4, window_bounds = array<i64: 1, 128>}, {pipeline_mode = #tpu.pipeline_mode<synchronous>, transform_indices = @transform_5, window_bounds = array<i64: 64, 128>}, {pipeline_mode = #tpu.pipeline_mode<synchronous>, transform_indices = @transform_6, window_bounds = array<i64: 8, 128>}]} {
    %c0 = arith.constant 0 : index
    %c0_0 = arith.constant 0 : index
    %0 = vector.load %arg4[%c0, %c0_0] : memref<128x128xf32, #tpu.memory_space<vmem>>, vector<128x128xf32>
    %c0_1 = arith.constant 0 : index
    %c0_2 = arith.constant 0 : index
    %1 = vector.load %arg3[%c0_1, %c0_2] : memref<8x128xf32, #tpu.memory_space<vmem>>, vector<8x128xf32>
    %c0_i32 = arith.constant 0 : i32
    %c8_i32 = arith.constant 8 : i32
    %2 = arith.muli %c0_i32, %c8_i32 : i32
    %3 = tpu.assume_multiple %2, 8 : i32
    %4 = arith.index_cast %c0_i32 : i32 to index
    %c0_3 = arith.constant 0 : index
    %5 = memref.load %arg1[%4, %c0_3] : memref<8x8xi32, #tpu.memory_space<smem>>
    %6 = arith.index_cast %5 : i32 to index
    %c0_4 = arith.constant 0 : index
    %7 = vector.load %arg2[%6, %c0_4] : memref<64x128xf32, #tpu.memory_space<vmem>>, vector<1x128xf32>
    %c0_i32_5 = arith.constant 0 : i32
    %8 = arith.addi %3, %c0_i32_5 : i32
    %9 = arith.index_cast %8 : i32 to index
    %c0_6 = arith.constant 0 : index
    %10 = vector.load %arg9[%9, %c0_6] : memref<64x128xf32, #tpu.memory_space<vmem>>, vector<1x128xf32>
    tpu.vector_store %arg9[%9, %c0_6], %7 {strides = array<i32>} : memref<64x128xf32, #tpu.memory_space<vmem>>, vector<1x128xf32>,
    %11 = arith.index_cast %c0_i32 : i32 to index
    %c1 = arith.constant 1 : index
    %12 = memref.load %arg1[%11, %c1] : memref<8x8xi32, #tpu.memory_space<smem>>
    %13 = arith.index_cast %12 : i32 to index
    %c0_7 = arith.constant 0 : index
    %14 = vector.load %arg2[%13, %c0_7] : memref<64x128xf32, #tpu.memory_space<vmem>>, vector<1x128xf32>
    %c1_i32 = arith.constant 1 : i32
    %15 = arith.addi %3, %c1_i32 : i32
    %16 = arith.index_cast %15 : i32 to index
    %c0_8 = arith.constant 0 : index
    %17 = vector.load %arg9[%16, %c0_8] : memref<64x128xf32, #tpu.memory_space<vmem>>, vector<1x128xf32>
    tpu.vector_store %arg9[%16, %c0_8], %14 {strides = array<i32>} : memref<64x128xf32, #tpu.memory_space<vmem>>, vector<1x128xf32>,
    %18 = arith.index_cast %c0_i32 : i32 to index
    %c2 = arith.constant 2 : index
    %19 = memref.load %arg1[%18, %c2] : memref<8x8xi32, #tpu.memory_space<smem>>
    %20 = arith.index_cast %19 : i32 to index
    %c0_9 = arith.constant 0 : index
    %21 = vector.load %arg2[%20, %c0_9] : memref<64x128xf32, #tpu.memory_space<vmem>>, vector<1x128xf32>
    %c2_i32 = arith.constant 2 : i32
    %22 = arith.addi %3, %c2_i32 : i32
    %23 = arith.index_cast %22 : i32 to index
    %c0_10 = arith.constant 0 : index
    %24 = vector.load %arg9[%23, %c0_10] : memref<64x128xf32, #tpu.memory_space<vmem>>, vector<1x128xf32>
    tpu.vector_store %arg9[%23, %c0_10], %21 {strides = array<i32>} : memref<64x128xf32, #tpu.memory_space<vmem>>, vector<1x128xf32>,
    %25 = arith.index_cast %c0_i32 : i32 to index
    %c3 = arith.constant 3 : index
    %26 = memref.load %arg1[%25, %c3] : memref<8x8xi32, #tpu.memory_space<smem>>
    %27 = arith.index_cast %26 : i32 to index
    %c0_11 = arith.constant 0 : index
    %28 = vector.load %arg2[%27, %c0_11] : memref<64x128xf32, #tpu.memory_space<vmem>>, vector<1x128xf32>
    %c3_i32 = arith.constant 3 : i32
    %29 = arith.addi %3, %c3_i32 : i32
    %30 = arith.index_cast %29 : i32 to index
    %c0_12 = arith.constant 0 : index
    %31 = vector.load %arg9[%30, %c0_12] : memref<64x128xf32, #tpu.memory_space<vmem>>, vector<1x128xf32>
    tpu.vector_store %arg9[%30, %c0_12], %28 {strides = array<i32>} : memref<64x128xf32, #tpu.memory_space<vmem>>, vector<1x128xf32>,
    %32 = arith.index_cast %c0_i32 : i32 to index
    %c4 = arith.constant 4 : index
    %33 = memref.load %arg1[%32, %c4] : memref<8x8xi32, #tpu.memory_space<smem>>
    %34 = arith.index_cast %33 : i32 to index
    %c0_13 = arith.constant 0 : index
    %35 = vector.load %arg2[%34, %c0_13] : memref<64x128xf32, #tpu.memory_space<vmem>>, vector<1x128xf32>
    %c4_i32 = arith.constant 4 : i32
    %36 = arith.addi %3, %c4_i32 : i32
    %37 = arith.index_cast %36 : i32 to index
    %c0_14 = arith.constant 0 : index
    %38 = vector.load %arg9[%37, %c0_14] : memref<64x128xf32, #tpu.memory_space<vmem>>, vector<1x128xf32>
    tpu.vector_store %arg9[%37, %c0_14], %35 {strides = array<i32>} : memref<64x128xf32, #tpu.memory_space<vmem>>, vector<1x128xf32>,
    %39 = arith.index_cast %c0_i32 : i32 to index
    %c5 = arith.constant 5 : index
    %40 = memref.load %arg1[%39, %c5] : memref<8x8xi32, #tpu.memory_space<smem>>
    %41 = arith.index_cast %40 : i32 to index
    %c0_15 = arith.constant 0 : index
    %42 = vector.load %arg2[%41, %c0_15] : memref<64x128xf32, #tpu.memory_space<vmem>>, vector<1x128xf32>
    %c5_i32 = arith.constant 5 : i32
    %43 = arith.addi %3, %c5_i32 : i32
    %44 = arith.index_cast %43 : i32 to index
    %c0_16 = arith.constant 0 : index
    %45 = vector.load %arg9[%44, %c0_16] : memref<64x128xf32, #tpu.memory_space<vmem>>, vector<1x128xf32>
    tpu.vector_store %arg9[%44, %c0_16], %42 {strides = array<i32>} : memref<64x128xf32, #tpu.memory_space<vmem>>, vector<1x128xf32>,
    %46 = arith.index_cast %c0_i32 : i32 to index
    %c6 = arith.constant 6 : index
    %47 = memref.load %arg1[%46, %c6] : memref<8x8xi32, #tpu.memory_space<smem>>
    %48 = arith.index_cast %47 : i32 to index
    %c0_17 = arith.constant 0 : index
    %49 = vector.load %arg2[%48, %c0_17] : memref<64x128xf32, #tpu.memory_space<vmem>>, vector<1x128xf32>
    %c6_i32 = arith.constant 6 : i32
    %50 = arith.addi %3, %c6_i32 : i32
    %51 = arith.index_cast %50 : i32 to index
    %c0_18 = arith.constant 0 : index
    %52 = vector.load %arg9[%51, %c0_18] : memref<64x128xf32, #tpu.memory_space<vmem>>, vector<1x128xf32>
    tpu.vector_store %arg9[%51, %c0_18], %49 {strides = array<i32>} : memref<64x128xf32, #tpu.memory_space<vmem>>, vector<1x128xf32>,
    %53 = arith.index_cast %c0_i32 : i32 to index
    %c7 = arith.constant 7 : index
    %54 = memref.load %arg1[%53, %c7] : memref<8x8xi32, #tpu.memory_space<smem>>
    %55 = arith.index_cast %54 : i32 to index
    %c0_19 = arith.constant 0 : index
    %56 = vector.load %arg2[%55, %c0_19] : memref<64x128xf32, #tpu.memory_space<vmem>>, vector<1x128xf32>
    %c7_i32 = arith.constant 7 : i32
    %57 = arith.addi %3, %c7_i32 : i32
    %58 = arith.index_cast %57 : i32 to index
    %c0_20 = arith.constant 0 : index
    %59 = vector.load %arg9[%58, %c0_20] : memref<64x128xf32, #tpu.memory_space<vmem>>, vector<1x128xf32>
    tpu.vector_store %arg9[%58, %c0_20], %56 {strides = array<i32>} : memref<64x128xf32, #tpu.memory_space<vmem>>, vector<1x128xf32>,
    %60 = arith.index_cast %3 : i32 to index
    %c0_21 = arith.constant 0 : index
    %61 = vector.load %arg9[%60, %c0_21] : memref<64x128xf32, #tpu.memory_space<vmem>>, vector<8x128xf32>
    %cst = arith.constant dense<0.000000e+00> : vector<8x128xf32>
    %62 = tpu.matmul %1, %0, %cst {dimension_numbers = #tpu.dot_dimension_numbers<[1], [0], [0], [1], [0, 0, 1, 1], [], []>} : vector<8x128xf32>, vector<128x128xf32>, vector<8x128xf32> -> vector<8x128xf32>
    %63 = arith.addf %61, %62 : vector<8x128xf32>
    %64 = math.tanh %63 : vector<8x128xf32>
    %65 = arith.index_cast %3 : i32 to index
    %c0_22 = arith.constant 0 : index
    %66 = vector.load %arg9[%65, %c0_22] : memref<64x128xf32, #tpu.memory_space<vmem>>, vector<8x128xf32>
    tpu.vector_store %arg9[%65, %c0_22], %64 {strides = array<i32>} : memref<64x128xf32, #tpu.memory_space<vmem>>, vector<8x128xf32>,
    %c1_i32_23 = arith.constant 1 : i32
    %c8_i32_24 = arith.constant 8 : i32
    %67 = arith.muli %c1_i32_23, %c8_i32_24 : i32
    %68 = tpu.assume_multiple %67, 8 : i32
    %69 = arith.index_cast %c1_i32_23 : i32 to index
    %c0_25 = arith.constant 0 : index
    %70 = memref.load %arg1[%69, %c0_25] : memref<8x8xi32, #tpu.memory_space<smem>>
    %71 = arith.index_cast %70 : i32 to index
    %c0_26 = arith.constant 0 : index
    %72 = vector.load %arg2[%71, %c0_26] : memref<64x128xf32, #tpu.memory_space<vmem>>, vector<1x128xf32>
    %c0_i32_27 = arith.constant 0 : i32
    %73 = arith.addi %68, %c0_i32_27 : i32
    %74 = arith.index_cast %73 : i32 to index
    %c0_28 = arith.constant 0 : index
    %75 = vector.load %arg9[%74, %c0_28] : memref<64x128xf32, #tpu.memory_space<vmem>>, vector<1x128xf32>
    tpu.vector_store %arg9[%74, %c0_28], %72 {strides = array<i32>} : memref<64x128xf32, #tpu.memory_space<vmem>>, vector<1x128xf32>,
    %76 = arith.index_cast %c1_i32_23 : i32 to index
    %c1_29 = arith.constant 1 : index
    %77 = memref.load %arg1[%76, %c1_29] : memref<8x8xi32, #tpu.memory_space<smem>>
    %78 = arith.index_cast %77 : i32 to index
    %c0_30 = arith.constant 0 : index
    %79 = vector.load %arg2[%78, %c0_30] : memref<64x128xf32, #tpu.memory_space<vmem>>, vector<1x128xf32>
    %c1_i32_31 = arith.constant 1 : i32
    %80 = arith.addi %68, %c1_i32_31 : i32
    %81 = arith.index_cast %80 : i32 to index
    %c0_32 = arith.constant 0 : index
    %82 = vector.load %arg9[%81, %c0_32] : memref<64x128xf32, #tpu.memory_space<vmem>>, vector<1x128xf32>
    tpu.vector_store %arg9[%81, %c0_32], %79 {strides = array<i32>} : memref<64x128xf32, #tpu.memory_space<vmem>>, vector<1x128xf32>,
    %83 = arith.index_cast %c1_i32_23 : i32 to index
    %c2_33 = arith.constant 2 : index
    %84 = memref.load %arg1[%83, %c2_33] : memref<8x8xi32, #tpu.memory_space<smem>>
    %85 = arith.index_cast %84 : i32 to index
    %c0_34 = arith.constant 0 : index
    %86 = vector.load %arg2[%85, %c0_34] : memref<64x128xf32, #tpu.memory_space<vmem>>, vector<1x128xf32>
    %c2_i32_35 = arith.constant 2 : i32
    %87 = arith.addi %68, %c2_i32_35 : i32
    %88 = arith.index_cast %87 : i32 to index
    %c0_36 = arith.constant 0 : index
    %89 = vector.load %arg9[%88, %c0_36] : memref<64x128xf32, #tpu.memory_space<vmem>>, vector<1x128xf32>
    tpu.vector_store %arg9[%88, %c0_36], %86 {strides = array<i32>} : memref<64x128xf32, #tpu.memory_space<vmem>>, vector<1x128xf32>,
    %90 = arith.index_cast %c1_i32_23 : i32 to index
    %c3_37 = arith.constant 3 : index
    %91 = memref.load %arg1[%90, %c3_37] : memref<8x8xi32, #tpu.memory_space<smem>>
    %92 = arith.index_cast %91 : i32 to index
    %c0_38 = arith.constant 0 : index
    %93 = vector.load %arg2[%92, %c0_38] : memref<64x128xf32, #tpu.memory_space<vmem>>, vector<1x128xf32>
    %c3_i32_39 = arith.constant 3 : i32
    %94 = arith.addi %68, %c3_i32_39 : i32
    %95 = arith.index_cast %94 : i32 to index
    %c0_40 = arith.constant 0 : index
    %96 = vector.load %arg9[%95, %c0_40] : memref<64x128xf32, #tpu.memory_space<vmem>>, vector<1x128xf32>
    tpu.vector_store %arg9[%95, %c0_40], %93 {strides = array<i32>} : memref<64x128xf32, #tpu.memory_space<vmem>>, vector<1x128xf32>,
    %97 = arith.index_cast %c1_i32_23 : i32 to index
    %c4_41 = arith.constant 4 : index
    %98 = memref.load %arg1[%97, %c4_41] : memref<8x8xi32, #tpu.memory_space<smem>>
    %99 = arith.index_cast %98 : i32 to index
    %c0_42 = arith.constant 0 : index
    %100 = vector.load %arg2[%99, %c0_42] : memref<64x128xf32, #tpu.memory_space<vmem>>, vector<1x128xf32>
    %c4_i32_43 = arith.constant 4 : i32
    %101 = arith.addi %68, %c4_i32_43 : i32
    %102 = arith.index_cast %101 : i32 to index
    %c0_44 = arith.constant 0 : index
    %103 = vector.load %arg9[%102, %c0_44] : memref<64x128xf32, #tpu.memory_space<vmem>>, vector<1x128xf32>
    tpu.vector_store %arg9[%102, %c0_44], %100 {strides = array<i32>} : memref<64x128xf32, #tpu.memory_space<vmem>>, vector<1x128xf32>,
    %104 = arith.index_cast %c1_i32_23 : i32 to index
    %c5_45 = arith.constant 5 : index
    %105 = memref.load %arg1[%104, %c5_45] : memref<8x8xi32, #tpu.memory_space<smem>>
    %106 = arith.index_cast %105 : i32 to index
    %c0_46 = arith.constant 0 : index
    %107 = vector.load %arg2[%106, %c0_46] : memref<64x128xf32, #tpu.memory_space<vmem>>, vector<1x128xf32>
    %c5_i32_47 = arith.constant 5 : i32
    %108 = arith.addi %68, %c5_i32_47 : i32
    %109 = arith.index_cast %108 : i32 to index
    %c0_48 = arith.constant 0 : index
    %110 = vector.load %arg9[%109, %c0_48] : memref<64x128xf32, #tpu.memory_space<vmem>>, vector<1x128xf32>
    tpu.vector_store %arg9[%109, %c0_48], %107 {strides = array<i32>} : memref<64x128xf32, #tpu.memory_space<vmem>>, vector<1x128xf32>,
    %111 = arith.index_cast %c1_i32_23 : i32 to index
    %c6_49 = arith.constant 6 : index
    %112 = memref.load %arg1[%111, %c6_49] : memref<8x8xi32, #tpu.memory_space<smem>>
    %113 = arith.index_cast %112 : i32 to index
    %c0_50 = arith.constant 0 : index
    %114 = vector.load %arg2[%113, %c0_50] : memref<64x128xf32, #tpu.memory_space<vmem>>, vector<1x128xf32>
    %c6_i32_51 = arith.constant 6 : i32
    %115 = arith.addi %68, %c6_i32_51 : i32
    %116 = arith.index_cast %115 : i32 to index
    %c0_52 = arith.constant 0 : index
    %117 = vector.load %arg9[%116, %c0_52] : memref<64x128xf32, #tpu.memory_space<vmem>>, vector<1x128xf32>
    tpu.vector_store %arg9[%116, %c0_52], %114 {strides = array<i32>} : memref<64x128xf32, #tpu.memory_space<vmem>>, vector<1x128xf32>,
    %118 = arith.index_cast %c1_i32_23 : i32 to index
    %c7_53 = arith.constant 7 : index
    %119 = memref.load %arg1[%118, %c7_53] : memref<8x8xi32, #tpu.memory_space<smem>>
    %120 = arith.index_cast %119 : i32 to index
    %c0_54 = arith.constant 0 : index
    %121 = vector.load %arg2[%120, %c0_54] : memref<64x128xf32, #tpu.memory_space<vmem>>, vector<1x128xf32>
    %c7_i32_55 = arith.constant 7 : i32
    %122 = arith.addi %68, %c7_i32_55 : i32
    %123 = arith.index_cast %122 : i32 to index
    %c0_56 = arith.constant 0 : index
    %124 = vector.load %arg9[%123, %c0_56] : memref<64x128xf32, #tpu.memory_space<vmem>>, vector<1x128xf32>
    tpu.vector_store %arg9[%123, %c0_56], %121 {strides = array<i32>} : memref<64x128xf32, #tpu.memory_space<vmem>>, vector<1x128xf32>,
    %125 = arith.index_cast %68 : i32 to index
    %c0_57 = arith.constant 0 : index
    %126 = vector.load %arg9[%125, %c0_57] : memref<64x128xf32, #tpu.memory_space<vmem>>, vector<8x128xf32>
    %cst_58 = arith.constant dense<0.000000e+00> : vector<8x128xf32>
    %127 = tpu.matmul %64, %0, %cst_58 {dimension_numbers = #tpu.dot_dimension_numbers<[1], [0], [0], [1], [0, 0, 1, 1], [], []>} : vector<8x128xf32>, vector<128x128xf32>, vector<8x128xf32> -> vector<8x128xf32>
    %128 = arith.addf %126, %127 : vector<8x128xf32>
    %129 = math.tanh %128 : vector<8x128xf32>
    %130 = arith.index_cast %68 : i32 to index
    %c0_59 = arith.constant 0 : index
    %131 = vector.load %arg9[%130, %c0_59] : memref<64x128xf32, #tpu.memory_space<vmem>>, vector<8x128xf32>
    tpu.vector_store %arg9[%130, %c0_59], %129 {strides = array<i32>} : memref<64x128xf32, #tpu.memory_space<vmem>>, vector<8x128xf32>,
    %c2_i32_60 = arith.constant 2 : i32
    %c8_i32_61 = arith.constant 8 : i32
    %132 = arith.muli %c2_i32_60, %c8_i32_61 : i32
    %133 = tpu.assume_multiple %132, 8 : i32
    %134 = arith.index_cast %c2_i32_60 : i32 to index
    %c0_62 = arith.constant 0 : index
    %135 = memref.load %arg1[%134, %c0_62] : memref<8x8xi32, #tpu.memory_space<smem>>
    %136 = arith.index_cast %135 : i32 to index
    %c0_63 = arith.constant 0 : index
    %137 = vector.load %arg2[%136, %c0_63] : memref<64x128xf32, #tpu.memory_space<vmem>>, vector<1x128xf32>
    %c0_i32_64 = arith.constant 0 : i32
    %138 = arith.addi %133, %c0_i32_64 : i32
    %139 = arith.index_cast %138 : i32 to index
    %c0_65 = arith.constant 0 : index
    %140 = vector.load %arg9[%139, %c0_65] : memref<64x128xf32, #tpu.memory_space<vmem>>, vector<1x128xf32>
    tpu.vector_store %arg9[%139, %c0_65], %137 {strides = array<i32>} : memref<64x128xf32, #tpu.memory_space<vmem>>, vector<1x128xf32>,
    %141 = arith.index_cast %c2_i32_60 : i32 to index
    %c1_66 = arith.constant 1 : index
    %142 = memref.load %arg1[%141, %c1_66] : memref<8x8xi32, #tpu.memory_space<smem>>
    %143 = arith.index_cast %142 : i32 to index
    %c0_67 = arith.constant 0 : index
    %144 = vector.load %arg2[%143, %c0_67] : memref<64x128xf32, #tpu.memory_space<vmem>>, vector<1x128xf32>
    %c1_i32_68 = arith.constant 1 : i32
    %145 = arith.addi %133, %c1_i32_68 : i32
    %146 = arith.index_cast %145 : i32 to index
    %c0_69 = arith.constant 0 : index
    %147 = vector.load %arg9[%146, %c0_69] : memref<64x128xf32, #tpu.memory_space<vmem>>, vector<1x128xf32>
    tpu.vector_store %arg9[%146, %c0_69], %144 {strides = array<i32>} : memref<64x128xf32, #tpu.memory_space<vmem>>, vector<1x128xf32>,
    %148 = arith.index_cast %c2_i32_60 : i32 to index
    %c2_70 = arith.constant 2 : index
    %149 = memref.load %arg1[%148, %c2_70] : memref<8x8xi32, #tpu.memory_space<smem>>
    %150 = arith.index_cast %149 : i32 to index
    %c0_71 = arith.constant 0 : index
    %151 = vector.load %arg2[%150, %c0_71] : memref<64x128xf32, #tpu.memory_space<vmem>>, vector<1x128xf32>
    %c2_i32_72 = arith.constant 2 : i32
    %152 = arith.addi %133, %c2_i32_72 : i32
    %153 = arith.index_cast %152 : i32 to index
    %c0_73 = arith.constant 0 : index
    %154 = vector.load %arg9[%153, %c0_73] : memref<64x128xf32, #tpu.memory_space<vmem>>, vector<1x128xf32>
    tpu.vector_store %arg9[%153, %c0_73], %151 {strides = array<i32>} : memref<64x128xf32, #tpu.memory_space<vmem>>, vector<1x128xf32>,
    %155 = arith.index_cast %c2_i32_60 : i32 to index
    %c3_74 = arith.constant 3 : index
    %156 = memref.load %arg1[%155, %c3_74] : memref<8x8xi32, #tpu.memory_space<smem>>
    %157 = arith.index_cast %156 : i32 to index
    %c0_75 = arith.constant 0 : index
    %158 = vector.load %arg2[%157, %c0_75] : memref<64x128xf32, #tpu.memory_space<vmem>>, vector<1x128xf32>
    %c3_i32_76 = arith.constant 3 : i32
    %159 = arith.addi %133, %c3_i32_76 : i32
    %160 = arith.index_cast %159 : i32 to index
    %c0_77 = arith.constant 0 : index
    %161 = vector.load %arg9[%160, %c0_77] : memref<64x128xf32, #tpu.memory_space<vmem>>, vector<1x128xf32>
    tpu.vector_store %arg9[%160, %c0_77], %158 {strides = array<i32>} : memref<64x128xf32, #tpu.memory_space<vmem>>, vector<1x128xf32>,
    %162 = arith.index_cast %c2_i32_60 : i32 to index
    %c4_78 = arith.constant 4 : index
    %163 = memref.load %arg1[%162, %c4_78] : memref<8x8xi32, #tpu.memory_space<smem>>
    %164 = arith.index_cast %163 : i32 to index
    %c0_79 = arith.constant 0 : index
    %165 = vector.load %arg2[%164, %c0_79] : memref<64x128xf32, #tpu.memory_space<vmem>>, vector<1x128xf32>
    %c4_i32_80 = arith.constant 4 : i32
    %166 = arith.addi %133, %c4_i32_80 : i32
    %167 = arith.index_cast %166 : i32 to index
    %c0_81 = arith.constant 0 : index
    %168 = vector.load %arg9[%167, %c0_81] : memref<64x128xf32, #tpu.memory_space<vmem>>, vector<1x128xf32>
    tpu.vector_store %arg9[%167, %c0_81], %165 {strides = array<i32>} : memref<64x128xf32, #tpu.memory_space<vmem>>, vector<1x128xf32>,
    %169 = arith.index_cast %c2_i32_60 : i32 to index
    %c5_82 = arith.constant 5 : index
    %170 = memref.load %arg1[%169, %c5_82] : memref<8x8xi32, #tpu.memory_space<smem>>
    %171 = arith.index_cast %170 : i32 to index
    %c0_83 = arith.constant 0 : index
    %172 = vector.load %arg2[%171, %c0_83] : memref<64x128xf32, #tpu.memory_space<vmem>>, vector<1x128xf32>
    %c5_i32_84 = arith.constant 5 : i32
    %173 = arith.addi %133, %c5_i32_84 : i32
    %174 = arith.index_cast %173 : i32 to index
    %c0_85 = arith.constant 0 : index
    %175 = vector.load %arg9[%174, %c0_85] : memref<64x128xf32, #tpu.memory_space<vmem>>, vector<1x128xf32>
    tpu.vector_store %arg9[%174, %c0_85], %172 {strides = array<i32>} : memref<64x128xf32, #tpu.memory_space<vmem>>, vector<1x128xf32>,
    %176 = arith.index_cast %c2_i32_60 : i32 to index
    %c6_86 = arith.constant 6 : index
    %177 = memref.load %arg1[%176, %c6_86] : memref<8x8xi32, #tpu.memory_space<smem>>
    %178 = arith.index_cast %177 : i32 to index
    %c0_87 = arith.constant 0 : index
    %179 = vector.load %arg2[%178, %c0_87] : memref<64x128xf32, #tpu.memory_space<vmem>>, vector<1x128xf32>
    %c6_i32_88 = arith.constant 6 : i32
    %180 = arith.addi %133, %c6_i32_88 : i32
    %181 = arith.index_cast %180 : i32 to index
    %c0_89 = arith.constant 0 : index
    %182 = vector.load %arg9[%181, %c0_89] : memref<64x128xf32, #tpu.memory_space<vmem>>, vector<1x128xf32>
    tpu.vector_store %arg9[%181, %c0_89], %179 {strides = array<i32>} : memref<64x128xf32, #tpu.memory_space<vmem>>, vector<1x128xf32>,
    %183 = arith.index_cast %c2_i32_60 : i32 to index
    %c7_90 = arith.constant 7 : index
    %184 = memref.load %arg1[%183, %c7_90] : memref<8x8xi32, #tpu.memory_space<smem>>
    %185 = arith.index_cast %184 : i32 to index
    %c0_91 = arith.constant 0 : index
    %186 = vector.load %arg2[%185, %c0_91] : memref<64x128xf32, #tpu.memory_space<vmem>>, vector<1x128xf32>
    %c7_i32_92 = arith.constant 7 : i32
    %187 = arith.addi %133, %c7_i32_92 : i32
    %188 = arith.index_cast %187 : i32 to index
    %c0_93 = arith.constant 0 : index
    %189 = vector.load %arg9[%188, %c0_93] : memref<64x128xf32, #tpu.memory_space<vmem>>, vector<1x128xf32>
    tpu.vector_store %arg9[%188, %c0_93], %186 {strides = array<i32>} : memref<64x128xf32, #tpu.memory_space<vmem>>, vector<1x128xf32>,
    %190 = arith.index_cast %133 : i32 to index
    %c0_94 = arith.constant 0 : index
    %191 = vector.load %arg9[%190, %c0_94] : memref<64x128xf32, #tpu.memory_space<vmem>>, vector<8x128xf32>
    %cst_95 = arith.constant dense<0.000000e+00> : vector<8x128xf32>
    %192 = tpu.matmul %129, %0, %cst_95 {dimension_numbers = #tpu.dot_dimension_numbers<[1], [0], [0], [1], [0, 0, 1, 1], [], []>} : vector<8x128xf32>, vector<128x128xf32>, vector<8x128xf32> -> vector<8x128xf32>
    %193 = arith.addf %191, %192 : vector<8x128xf32>
    %194 = math.tanh %193 : vector<8x128xf32>
    %195 = arith.index_cast %133 : i32 to index
    %c0_96 = arith.constant 0 : index
    %196 = vector.load %arg9[%195, %c0_96] : memref<64x128xf32, #tpu.memory_space<vmem>>, vector<8x128xf32>
    tpu.vector_store %arg9[%195, %c0_96], %194 {strides = array<i32>} : memref<64x128xf32, #tpu.memory_space<vmem>>, vector<8x128xf32>,
    %c3_i32_97 = arith.constant 3 : i32
    %c8_i32_98 = arith.constant 8 : i32
    %197 = arith.muli %c3_i32_97, %c8_i32_98 : i32
    %198 = tpu.assume_multiple %197, 8 : i32
    %199 = arith.index_cast %c3_i32_97 : i32 to index
    %c0_99 = arith.constant 0 : index
    %200 = memref.load %arg1[%199, %c0_99] : memref<8x8xi32, #tpu.memory_space<smem>>
    %201 = arith.index_cast %200 : i32 to index
    %c0_100 = arith.constant 0 : index
    %202 = vector.load %arg2[%201, %c0_100] : memref<64x128xf32, #tpu.memory_space<vmem>>, vector<1x128xf32>
    %c0_i32_101 = arith.constant 0 : i32
    %203 = arith.addi %198, %c0_i32_101 : i32
    %204 = arith.index_cast %203 : i32 to index
    %c0_102 = arith.constant 0 : index
    %205 = vector.load %arg9[%204, %c0_102] : memref<64x128xf32, #tpu.memory_space<vmem>>, vector<1x128xf32>
    tpu.vector_store %arg9[%204, %c0_102], %202 {strides = array<i32>} : memref<64x128xf32, #tpu.memory_space<vmem>>, vector<1x128xf32>,
    %206 = arith.index_cast %c3_i32_97 : i32 to index
    %c1_103 = arith.constant 1 : index
    %207 = memref.load %arg1[%206, %c1_103] : memref<8x8xi32, #tpu.memory_space<smem>>
    %208 = arith.index_cast %207 : i32 to index
    %c0_104 = arith.constant 0 : index
    %209 = vector.load %arg2[%208, %c0_104] : memref<64x128xf32, #tpu.memory_space<vmem>>, vector<1x128xf32>
    %c1_i32_105 = arith.constant 1 : i32
    %210 = arith.addi %198, %c1_i32_105 : i32
    %211 = arith.index_cast %210 : i32 to index
    %c0_106 = arith.constant 0 : index
    %212 = vector.load %arg9[%211, %c0_106] : memref<64x128xf32, #tpu.memory_space<vmem>>, vector<1x128xf32>
    tpu.vector_store %arg9[%211, %c0_106], %209 {strides = array<i32>} : memref<64x128xf32, #tpu.memory_space<vmem>>, vector<1x128xf32>,
    %213 = arith.index_cast %c3_i32_97 : i32 to index
    %c2_107 = arith.constant 2 : index
    %214 = memref.load %arg1[%213, %c2_107] : memref<8x8xi32, #tpu.memory_space<smem>>
    %215 = arith.index_cast %214 : i32 to index
    %c0_108 = arith.constant 0 : index
    %216 = vector.load %arg2[%215, %c0_108] : memref<64x128xf32, #tpu.memory_space<vmem>>, vector<1x128xf32>
    %c2_i32_109 = arith.constant 2 : i32
    %217 = arith.addi %198, %c2_i32_109 : i32
    %218 = arith.index_cast %217 : i32 to index
    %c0_110 = arith.constant 0 : index
    %219 = vector.load %arg9[%218, %c0_110] : memref<64x128xf32, #tpu.memory_space<vmem>>, vector<1x128xf32>
    tpu.vector_store %arg9[%218, %c0_110], %216 {strides = array<i32>} : memref<64x128xf32, #tpu.memory_space<vmem>>, vector<1x128xf32>,
    %220 = arith.index_cast %c3_i32_97 : i32 to index
    %c3_111 = arith.constant 3 : index
    %221 = memref.load %arg1[%220, %c3_111] : memref<8x8xi32, #tpu.memory_space<smem>>
    %222 = arith.index_cast %221 : i32 to index
    %c0_112 = arith.constant 0 : index
    %223 = vector.load %arg2[%222, %c0_112] : memref<64x128xf32, #tpu.memory_space<vmem>>, vector<1x128xf32>
    %c3_i32_113 = arith.constant 3 : i32
    %224 = arith.addi %198, %c3_i32_113 : i32
    %225 = arith.index_cast %224 : i32 to index
    %c0_114 = arith.constant 0 : index
    %226 = vector.load %arg9[%225, %c0_114] : memref<64x128xf32, #tpu.memory_space<vmem>>, vector<1x128xf32>
    tpu.vector_store %arg9[%225, %c0_114], %223 {strides = array<i32>} : memref<64x128xf32, #tpu.memory_space<vmem>>, vector<1x128xf32>,
    %227 = arith.index_cast %c3_i32_97 : i32 to index
    %c4_115 = arith.constant 4 : index
    %228 = memref.load %arg1[%227, %c4_115] : memref<8x8xi32, #tpu.memory_space<smem>>
    %229 = arith.index_cast %228 : i32 to index
    %c0_116 = arith.constant 0 : index
    %230 = vector.load %arg2[%229, %c0_116] : memref<64x128xf32, #tpu.memory_space<vmem>>, vector<1x128xf32>
    %c4_i32_117 = arith.constant 4 : i32
    %231 = arith.addi %198, %c4_i32_117 : i32
    %232 = arith.index_cast %231 : i32 to index
    %c0_118 = arith.constant 0 : index
    %233 = vector.load %arg9[%232, %c0_118] : memref<64x128xf32, #tpu.memory_space<vmem>>, vector<1x128xf32>
    tpu.vector_store %arg9[%232, %c0_118], %230 {strides = array<i32>} : memref<64x128xf32, #tpu.memory_space<vmem>>, vector<1x128xf32>,
    %234 = arith.index_cast %c3_i32_97 : i32 to index
    %c5_119 = arith.constant 5 : index
    %235 = memref.load %arg1[%234, %c5_119] : memref<8x8xi32, #tpu.memory_space<smem>>
    %236 = arith.index_cast %235 : i32 to index
    %c0_120 = arith.constant 0 : index
    %237 = vector.load %arg2[%236, %c0_120] : memref<64x128xf32, #tpu.memory_space<vmem>>, vector<1x128xf32>
    %c5_i32_121 = arith.constant 5 : i32
    %238 = arith.addi %198, %c5_i32_121 : i32
    %239 = arith.index_cast %238 : i32 to index
    %c0_122 = arith.constant 0 : index
    %240 = vector.load %arg9[%239, %c0_122] : memref<64x128xf32, #tpu.memory_space<vmem>>, vector<1x128xf32>
    tpu.vector_store %arg9[%239, %c0_122], %237 {strides = array<i32>} : memref<64x128xf32, #tpu.memory_space<vmem>>, vector<1x128xf32>,
    %241 = arith.index_cast %c3_i32_97 : i32 to index
    %c6_123 = arith.constant 6 : index
    %242 = memref.load %arg1[%241, %c6_123] : memref<8x8xi32, #tpu.memory_space<smem>>
    %243 = arith.index_cast %242 : i32 to index
    %c0_124 = arith.constant 0 : index
    %244 = vector.load %arg2[%243, %c0_124] : memref<64x128xf32, #tpu.memory_space<vmem>>, vector<1x128xf32>
    %c6_i32_125 = arith.constant 6 : i32
    %245 = arith.addi %198, %c6_i32_125 : i32
    %246 = arith.index_cast %245 : i32 to index
    %c0_126 = arith.constant 0 : index
    %247 = vector.load %arg9[%246, %c0_126] : memref<64x128xf32, #tpu.memory_space<vmem>>, vector<1x128xf32>
    tpu.vector_store %arg9[%246, %c0_126], %244 {strides = array<i32>} : memref<64x128xf32, #tpu.memory_space<vmem>>, vector<1x128xf32>,
    %248 = arith.index_cast %c3_i32_97 : i32 to index
    %c7_127 = arith.constant 7 : index
    %249 = memref.load %arg1[%248, %c7_127] : memref<8x8xi32, #tpu.memory_space<smem>>
    %250 = arith.index_cast %249 : i32 to index
    %c0_128 = arith.constant 0 : index
    %251 = vector.load %arg2[%250, %c0_128] : memref<64x128xf32, #tpu.memory_space<vmem>>, vector<1x128xf32>
    %c7_i32_129 = arith.constant 7 : i32
    %252 = arith.addi %198, %c7_i32_129 : i32
    %253 = arith.index_cast %252 : i32 to index
    %c0_130 = arith.constant 0 : index
    %254 = vector.load %arg9[%253, %c0_130] : memref<64x128xf32, #tpu.memory_space<vmem>>, vector<1x128xf32>
    tpu.vector_store %arg9[%253, %c0_130], %251 {strides = array<i32>} : memref<64x128xf32, #tpu.memory_space<vmem>>, vector<1x128xf32>,
    %255 = arith.index_cast %198 : i32 to index
    %c0_131 = arith.constant 0 : index
    %256 = vector.load %arg9[%255, %c0_131] : memref<64x128xf32, #tpu.memory_space<vmem>>, vector<8x128xf32>
    %cst_132 = arith.constant dense<0.000000e+00> : vector<8x128xf32>
    %257 = tpu.matmul %194, %0, %cst_132 {dimension_numbers = #tpu.dot_dimension_numbers<[1], [0], [0], [1], [0, 0, 1, 1], [], []>} : vector<8x128xf32>, vector<128x128xf32>, vector<8x128xf32> -> vector<8x128xf32>
    %258 = arith.addf %256, %257 : vector<8x128xf32>
    %259 = math.tanh %258 : vector<8x128xf32>
    %260 = arith.index_cast %198 : i32 to index
    %c0_133 = arith.constant 0 : index
    %261 = vector.load %arg9[%260, %c0_133] : memref<64x128xf32, #tpu.memory_space<vmem>>, vector<8x128xf32>
    tpu.vector_store %arg9[%260, %c0_133], %259 {strides = array<i32>} : memref<64x128xf32, #tpu.memory_space<vmem>>, vector<8x128xf32>,
    %c4_i32_134 = arith.constant 4 : i32
    %c8_i32_135 = arith.constant 8 : i32
    %262 = arith.muli %c4_i32_134, %c8_i32_135 : i32
    %263 = tpu.assume_multiple %262, 8 : i32
    %264 = arith.index_cast %c4_i32_134 : i32 to index
    %c0_136 = arith.constant 0 : index
    %265 = memref.load %arg1[%264, %c0_136] : memref<8x8xi32, #tpu.memory_space<smem>>
    %266 = arith.index_cast %265 : i32 to index
    %c0_137 = arith.constant 0 : index
    %267 = vector.load %arg2[%266, %c0_137] : memref<64x128xf32, #tpu.memory_space<vmem>>, vector<1x128xf32>
    %c0_i32_138 = arith.constant 0 : i32
    %268 = arith.addi %263, %c0_i32_138 : i32
    %269 = arith.index_cast %268 : i32 to index
    %c0_139 = arith.constant 0 : index
    %270 = vector.load %arg9[%269, %c0_139] : memref<64x128xf32, #tpu.memory_space<vmem>>, vector<1x128xf32>
    tpu.vector_store %arg9[%269, %c0_139], %267 {strides = array<i32>} : memref<64x128xf32, #tpu.memory_space<vmem>>, vector<1x128xf32>,
    %271 = arith.index_cast %c4_i32_134 : i32 to index
    %c1_140 = arith.constant 1 : index
    %272 = memref.load %arg1[%271, %c1_140] : memref<8x8xi32, #tpu.memory_space<smem>>
    %273 = arith.index_cast %272 : i32 to index
    %c0_141 = arith.constant 0 : index
    %274 = vector.load %arg2[%273, %c0_141] : memref<64x128xf32, #tpu.memory_space<vmem>>, vector<1x128xf32>
    %c1_i32_142 = arith.constant 1 : i32
    %275 = arith.addi %263, %c1_i32_142 : i32
    %276 = arith.index_cast %275 : i32 to index
    %c0_143 = arith.constant 0 : index
    %277 = vector.load %arg9[%276, %c0_143] : memref<64x128xf32, #tpu.memory_space<vmem>>, vector<1x128xf32>
    tpu.vector_store %arg9[%276, %c0_143], %274 {strides = array<i32>} : memref<64x128xf32, #tpu.memory_space<vmem>>, vector<1x128xf32>,
    %278 = arith.index_cast %c4_i32_134 : i32 to index
    %c2_144 = arith.constant 2 : index
    %279 = memref.load %arg1[%278, %c2_144] : memref<8x8xi32, #tpu.memory_space<smem>>
    %280 = arith.index_cast %279 : i32 to index
    %c0_145 = arith.constant 0 : index
    %281 = vector.load %arg2[%280, %c0_145] : memref<64x128xf32, #tpu.memory_space<vmem>>, vector<1x128xf32>
    %c2_i32_146 = arith.constant 2 : i32
    %282 = arith.addi %263, %c2_i32_146 : i32
    %283 = arith.index_cast %282 : i32 to index
    %c0_147 = arith.constant 0 : index
    %284 = vector.load %arg9[%283, %c0_147] : memref<64x128xf32, #tpu.memory_space<vmem>>, vector<1x128xf32>
    tpu.vector_store %arg9[%283, %c0_147], %281 {strides = array<i32>} : memref<64x128xf32, #tpu.memory_space<vmem>>, vector<1x128xf32>,
    %285 = arith.index_cast %c4_i32_134 : i32 to index
    %c3_148 = arith.constant 3 : index
    %286 = memref.load %arg1[%285, %c3_148] : memref<8x8xi32, #tpu.memory_space<smem>>
    %287 = arith.index_cast %286 : i32 to index
    %c0_149 = arith.constant 0 : index
    %288 = vector.load %arg2[%287, %c0_149] : memref<64x128xf32, #tpu.memory_space<vmem>>, vector<1x128xf32>
    %c3_i32_150 = arith.constant 3 : i32
    %289 = arith.addi %263, %c3_i32_150 : i32
    %290 = arith.index_cast %289 : i32 to index
    %c0_151 = arith.constant 0 : index
    %291 = vector.load %arg9[%290, %c0_151] : memref<64x128xf32, #tpu.memory_space<vmem>>, vector<1x128xf32>
    tpu.vector_store %arg9[%290, %c0_151], %288 {strides = array<i32>} : memref<64x128xf32, #tpu.memory_space<vmem>>, vector<1x128xf32>,
    %292 = arith.index_cast %c4_i32_134 : i32 to index
    %c4_152 = arith.constant 4 : index
    %293 = memref.load %arg1[%292, %c4_152] : memref<8x8xi32, #tpu.memory_space<smem>>
    %294 = arith.index_cast %293 : i32 to index
    %c0_153 = arith.constant 0 : index
    %295 = vector.load %arg2[%294, %c0_153] : memref<64x128xf32, #tpu.memory_space<vmem>>, vector<1x128xf32>
    %c4_i32_154 = arith.constant 4 : i32
    %296 = arith.addi %263, %c4_i32_154 : i32
    %297 = arith.index_cast %296 : i32 to index
    %c0_155 = arith.constant 0 : index
    %298 = vector.load %arg9[%297, %c0_155] : memref<64x128xf32, #tpu.memory_space<vmem>>, vector<1x128xf32>
    tpu.vector_store %arg9[%297, %c0_155], %295 {strides = array<i32>} : memref<64x128xf32, #tpu.memory_space<vmem>>, vector<1x128xf32>,
    %299 = arith.index_cast %c4_i32_134 : i32 to index
    %c5_156 = arith.constant 5 : index
    %300 = memref.load %arg1[%299, %c5_156] : memref<8x8xi32, #tpu.memory_space<smem>>
    %301 = arith.index_cast %300 : i32 to index
    %c0_157 = arith.constant 0 : index
    %302 = vector.load %arg2[%301, %c0_157] : memref<64x128xf32, #tpu.memory_space<vmem>>, vector<1x128xf32>
    %c5_i32_158 = arith.constant 5 : i32
    %303 = arith.addi %263, %c5_i32_158 : i32
    %304 = arith.index_cast %303 : i32 to index
    %c0_159 = arith.constant 0 : index
    %305 = vector.load %arg9[%304, %c0_159] : memref<64x128xf32, #tpu.memory_space<vmem>>, vector<1x128xf32>
    tpu.vector_store %arg9[%304, %c0_159], %302 {strides = array<i32>} : memref<64x128xf32, #tpu.memory_space<vmem>>, vector<1x128xf32>,
    %306 = arith.index_cast %c4_i32_134 : i32 to index
    %c6_160 = arith.constant 6 : index
    %307 = memref.load %arg1[%306, %c6_160] : memref<8x8xi32, #tpu.memory_space<smem>>
    %308 = arith.index_cast %307 : i32 to index
    %c0_161 = arith.constant 0 : index
    %309 = vector.load %arg2[%308, %c0_161] : memref<64x128xf32, #tpu.memory_space<vmem>>, vector<1x128xf32>
    %c6_i32_162 = arith.constant 6 : i32
    %310 = arith.addi %263, %c6_i32_162 : i32
    %311 = arith.index_cast %310 : i32 to index
    %c0_163 = arith.constant 0 : index
    %312 = vector.load %arg9[%311, %c0_163] : memref<64x128xf32, #tpu.memory_space<vmem>>, vector<1x128xf32>
    tpu.vector_store %arg9[%311, %c0_163], %309 {strides = array<i32>} : memref<64x128xf32, #tpu.memory_space<vmem>>, vector<1x128xf32>,
    %313 = arith.index_cast %c4_i32_134 : i32 to index
    %c7_164 = arith.constant 7 : index
    %314 = memref.load %arg1[%313, %c7_164] : memref<8x8xi32, #tpu.memory_space<smem>>
    %315 = arith.index_cast %314 : i32 to index
    %c0_165 = arith.constant 0 : index
    %316 = vector.load %arg2[%315, %c0_165] : memref<64x128xf32, #tpu.memory_space<vmem>>, vector<1x128xf32>
    %c7_i32_166 = arith.constant 7 : i32
    %317 = arith.addi %263, %c7_i32_166 : i32
    %318 = arith.index_cast %317 : i32 to index
    %c0_167 = arith.constant 0 : index
    %319 = vector.load %arg9[%318, %c0_167] : memref<64x128xf32, #tpu.memory_space<vmem>>, vector<1x128xf32>
    tpu.vector_store %arg9[%318, %c0_167], %316 {strides = array<i32>} : memref<64x128xf32, #tpu.memory_space<vmem>>, vector<1x128xf32>,
    %320 = arith.index_cast %263 : i32 to index
    %c0_168 = arith.constant 0 : index
    %321 = vector.load %arg9[%320, %c0_168] : memref<64x128xf32, #tpu.memory_space<vmem>>, vector<8x128xf32>
    %cst_169 = arith.constant dense<0.000000e+00> : vector<8x128xf32>
    %322 = tpu.matmul %259, %0, %cst_169 {dimension_numbers = #tpu.dot_dimension_numbers<[1], [0], [0], [1], [0, 0, 1, 1], [], []>} : vector<8x128xf32>, vector<128x128xf32>, vector<8x128xf32> -> vector<8x128xf32>
    %323 = arith.addf %321, %322 : vector<8x128xf32>
    %324 = math.tanh %323 : vector<8x128xf32>
    %325 = arith.index_cast %263 : i32 to index
    %c0_170 = arith.constant 0 : index
    %326 = vector.load %arg9[%325, %c0_170] : memref<64x128xf32, #tpu.memory_space<vmem>>, vector<8x128xf32>
    tpu.vector_store %arg9[%325, %c0_170], %324 {strides = array<i32>} : memref<64x128xf32, #tpu.memory_space<vmem>>, vector<8x128xf32>,
    %c5_i32_171 = arith.constant 5 : i32
    %c8_i32_172 = arith.constant 8 : i32
    %327 = arith.muli %c5_i32_171, %c8_i32_172 : i32
    %328 = tpu.assume_multiple %327, 8 : i32
    %329 = arith.index_cast %c5_i32_171 : i32 to index
    %c0_173 = arith.constant 0 : index
    %330 = memref.load %arg1[%329, %c0_173] : memref<8x8xi32, #tpu.memory_space<smem>>
    %331 = arith.index_cast %330 : i32 to index
    %c0_174 = arith.constant 0 : index
    %332 = vector.load %arg2[%331, %c0_174] : memref<64x128xf32, #tpu.memory_space<vmem>>, vector<1x128xf32>
    %c0_i32_175 = arith.constant 0 : i32
    %333 = arith.addi %328, %c0_i32_175 : i32
    %334 = arith.index_cast %333 : i32 to index
    %c0_176 = arith.constant 0 : index
    %335 = vector.load %arg9[%334, %c0_176] : memref<64x128xf32, #tpu.memory_space<vmem>>, vector<1x128xf32>
    tpu.vector_store %arg9[%334, %c0_176], %332 {strides = array<i32>} : memref<64x128xf32, #tpu.memory_space<vmem>>, vector<1x128xf32>,
    %336 = arith.index_cast %c5_i32_171 : i32 to index
    %c1_177 = arith.constant 1 : index
    %337 = memref.load %arg1[%336, %c1_177] : memref<8x8xi32, #tpu.memory_space<smem>>
    %338 = arith.index_cast %337 : i32 to index
    %c0_178 = arith.constant 0 : index
    %339 = vector.load %arg2[%338, %c0_178] : memref<64x128xf32, #tpu.memory_space<vmem>>, vector<1x128xf32>
    %c1_i32_179 = arith.constant 1 : i32
    %340 = arith.addi %328, %c1_i32_179 : i32
    %341 = arith.index_cast %340 : i32 to index
    %c0_180 = arith.constant 0 : index
    %342 = vector.load %arg9[%341, %c0_180] : memref<64x128xf32, #tpu.memory_space<vmem>>, vector<1x128xf32>
    tpu.vector_store %arg9[%341, %c0_180], %339 {strides = array<i32>} : memref<64x128xf32, #tpu.memory_space<vmem>>, vector<1x128xf32>,
    %343 = arith.index_cast %c5_i32_171 : i32 to index
    %c2_181 = arith.constant 2 : index
    %344 = memref.load %arg1[%343, %c2_181] : memref<8x8xi32, #tpu.memory_space<smem>>
    %345 = arith.index_cast %344 : i32 to index
    %c0_182 = arith.constant 0 : index
    %346 = vector.load %arg2[%345, %c0_182] : memref<64x128xf32, #tpu.memory_space<vmem>>, vector<1x128xf32>
    %c2_i32_183 = arith.constant 2 : i32
    %347 = arith.addi %328, %c2_i32_183 : i32
    %348 = arith.index_cast %347 : i32 to index
    %c0_184 = arith.constant 0 : index
    %349 = vector.load %arg9[%348, %c0_184] : memref<64x128xf32, #tpu.memory_space<vmem>>, vector<1x128xf32>
    tpu.vector_store %arg9[%348, %c0_184], %346 {strides = array<i32>} : memref<64x128xf32, #tpu.memory_space<vmem>>, vector<1x128xf32>,
    %350 = arith.index_cast %c5_i32_171 : i32 to index
    %c3_185 = arith.constant 3 : index
    %351 = memref.load %arg1[%350, %c3_185] : memref<8x8xi32, #tpu.memory_space<smem>>
    %352 = arith.index_cast %351 : i32 to index
    %c0_186 = arith.constant 0 : index
    %353 = vector.load %arg2[%352, %c0_186] : memref<64x128xf32, #tpu.memory_space<vmem>>, vector<1x128xf32>
    %c3_i32_187 = arith.constant 3 : i32
    %354 = arith.addi %328, %c3_i32_187 : i32
    %355 = arith.index_cast %354 : i32 to index
    %c0_188 = arith.constant 0 : index
    %356 = vector.load %arg9[%355, %c0_188] : memref<64x128xf32, #tpu.memory_space<vmem>>, vector<1x128xf32>
    tpu.vector_store %arg9[%355, %c0_188], %353 {strides = array<i32>} : memref<64x128xf32, #tpu.memory_space<vmem>>, vector<1x128xf32>,
    %357 = arith.index_cast %c5_i32_171 : i32 to index
    %c4_189 = arith.constant 4 : index
    %358 = memref.load %arg1[%357, %c4_189] : memref<8x8xi32, #tpu.memory_space<smem>>
    %359 = arith.index_cast %358 : i32 to index
    %c0_190 = arith.constant 0 : index
    %360 = vector.load %arg2[%359, %c0_190] : memref<64x128xf32, #tpu.memory_space<vmem>>, vector<1x128xf32>
    %c4_i32_191 = arith.constant 4 : i32
    %361 = arith.addi %328, %c4_i32_191 : i32
    %362 = arith.index_cast %361 : i32 to index
    %c0_192 = arith.constant 0 : index
    %363 = vector.load %arg9[%362, %c0_192] : memref<64x128xf32, #tpu.memory_space<vmem>>, vector<1x128xf32>
    tpu.vector_store %arg9[%362, %c0_192], %360 {strides = array<i32>} : memref<64x128xf32, #tpu.memory_space<vmem>>, vector<1x128xf32>,
    %364 = arith.index_cast %c5_i32_171 : i32 to index
    %c5_193 = arith.constant 5 : index
    %365 = memref.load %arg1[%364, %c5_193] : memref<8x8xi32, #tpu.memory_space<smem>>
    %366 = arith.index_cast %365 : i32 to index
    %c0_194 = arith.constant 0 : index
    %367 = vector.load %arg2[%366, %c0_194] : memref<64x128xf32, #tpu.memory_space<vmem>>, vector<1x128xf32>
    %c5_i32_195 = arith.constant 5 : i32
    %368 = arith.addi %328, %c5_i32_195 : i32
    %369 = arith.index_cast %368 : i32 to index
    %c0_196 = arith.constant 0 : index
    %370 = vector.load %arg9[%369, %c0_196] : memref<64x128xf32, #tpu.memory_space<vmem>>, vector<1x128xf32>
    tpu.vector_store %arg9[%369, %c0_196], %367 {strides = array<i32>} : memref<64x128xf32, #tpu.memory_space<vmem>>, vector<1x128xf32>,
    %371 = arith.index_cast %c5_i32_171 : i32 to index
    %c6_197 = arith.constant 6 : index
    %372 = memref.load %arg1[%371, %c6_197] : memref<8x8xi32, #tpu.memory_space<smem>>
    %373 = arith.index_cast %372 : i32 to index
    %c0_198 = arith.constant 0 : index
    %374 = vector.load %arg2[%373, %c0_198] : memref<64x128xf32, #tpu.memory_space<vmem>>, vector<1x128xf32>
    %c6_i32_199 = arith.constant 6 : i32
    %375 = arith.addi %328, %c6_i32_199 : i32
    %376 = arith.index_cast %375 : i32 to index
    %c0_200 = arith.constant 0 : index
    %377 = vector.load %arg9[%376, %c0_200] : memref<64x128xf32, #tpu.memory_space<vmem>>, vector<1x128xf32>
    tpu.vector_store %arg9[%376, %c0_200], %374 {strides = array<i32>} : memref<64x128xf32, #tpu.memory_space<vmem>>, vector<1x128xf32>,
    %378 = arith.index_cast %c5_i32_171 : i32 to index
    %c7_201 = arith.constant 7 : index
    %379 = memref.load %arg1[%378, %c7_201] : memref<8x8xi32, #tpu.memory_space<smem>>
    %380 = arith.index_cast %379 : i32 to index
    %c0_202 = arith.constant 0 : index
    %381 = vector.load %arg2[%380, %c0_202] : memref<64x128xf32, #tpu.memory_space<vmem>>, vector<1x128xf32>
    %c7_i32_203 = arith.constant 7 : i32
    %382 = arith.addi %328, %c7_i32_203 : i32
    %383 = arith.index_cast %382 : i32 to index
    %c0_204 = arith.constant 0 : index
    %384 = vector.load %arg9[%383, %c0_204] : memref<64x128xf32, #tpu.memory_space<vmem>>, vector<1x128xf32>
    tpu.vector_store %arg9[%383, %c0_204], %381 {strides = array<i32>} : memref<64x128xf32, #tpu.memory_space<vmem>>, vector<1x128xf32>,
    %385 = arith.index_cast %328 : i32 to index
    %c0_205 = arith.constant 0 : index
    %386 = vector.load %arg9[%385, %c0_205] : memref<64x128xf32, #tpu.memory_space<vmem>>, vector<8x128xf32>
    %cst_206 = arith.constant dense<0.000000e+00> : vector<8x128xf32>
    %387 = tpu.matmul %324, %0, %cst_206 {dimension_numbers = #tpu.dot_dimension_numbers<[1], [0], [0], [1], [0, 0, 1, 1], [], []>} : vector<8x128xf32>, vector<128x128xf32>, vector<8x128xf32> -> vector<8x128xf32>
    %388 = arith.addf %386, %387 : vector<8x128xf32>
    %389 = math.tanh %388 : vector<8x128xf32>
    %390 = arith.index_cast %328 : i32 to index
    %c0_207 = arith.constant 0 : index
    %391 = vector.load %arg9[%390, %c0_207] : memref<64x128xf32, #tpu.memory_space<vmem>>, vector<8x128xf32>
    tpu.vector_store %arg9[%390, %c0_207], %389 {strides = array<i32>} : memref<64x128xf32, #tpu.memory_space<vmem>>, vector<8x128xf32>,
    %c6_i32_208 = arith.constant 6 : i32
    %c8_i32_209 = arith.constant 8 : i32
    %392 = arith.muli %c6_i32_208, %c8_i32_209 : i32
    %393 = tpu.assume_multiple %392, 8 : i32
    %394 = arith.index_cast %c6_i32_208 : i32 to index
    %c0_210 = arith.constant 0 : index
    %395 = memref.load %arg1[%394, %c0_210] : memref<8x8xi32, #tpu.memory_space<smem>>
    %396 = arith.index_cast %395 : i32 to index
    %c0_211 = arith.constant 0 : index
    %397 = vector.load %arg2[%396, %c0_211] : memref<64x128xf32, #tpu.memory_space<vmem>>, vector<1x128xf32>
    %c0_i32_212 = arith.constant 0 : i32
    %398 = arith.addi %393, %c0_i32_212 : i32
    %399 = arith.index_cast %398 : i32 to index
    %c0_213 = arith.constant 0 : index
    %400 = vector.load %arg9[%399, %c0_213] : memref<64x128xf32, #tpu.memory_space<vmem>>, vector<1x128xf32>
    tpu.vector_store %arg9[%399, %c0_213], %397 {strides = array<i32>} : memref<64x128xf32, #tpu.memory_space<vmem>>, vector<1x128xf32>,
    %401 = arith.index_cast %c6_i32_208 : i32 to index
    %c1_214 = arith.constant 1 : index
    %402 = memref.load %arg1[%401, %c1_214] : memref<8x8xi32, #tpu.memory_space<smem>>
    %403 = arith.index_cast %402 : i32 to index
    %c0_215 = arith.constant 0 : index
    %404 = vector.load %arg2[%403, %c0_215] : memref<64x128xf32, #tpu.memory_space<vmem>>, vector<1x128xf32>
    %c1_i32_216 = arith.constant 1 : i32
    %405 = arith.addi %393, %c1_i32_216 : i32
    %406 = arith.index_cast %405 : i32 to index
    %c0_217 = arith.constant 0 : index
    %407 = vector.load %arg9[%406, %c0_217] : memref<64x128xf32, #tpu.memory_space<vmem>>, vector<1x128xf32>
    tpu.vector_store %arg9[%406, %c0_217], %404 {strides = array<i32>} : memref<64x128xf32, #tpu.memory_space<vmem>>, vector<1x128xf32>,
    %408 = arith.index_cast %c6_i32_208 : i32 to index
    %c2_218 = arith.constant 2 : index
    %409 = memref.load %arg1[%408, %c2_218] : memref<8x8xi32, #tpu.memory_space<smem>>
    %410 = arith.index_cast %409 : i32 to index
    %c0_219 = arith.constant 0 : index
    %411 = vector.load %arg2[%410, %c0_219] : memref<64x128xf32, #tpu.memory_space<vmem>>, vector<1x128xf32>
    %c2_i32_220 = arith.constant 2 : i32
    %412 = arith.addi %393, %c2_i32_220 : i32
    %413 = arith.index_cast %412 : i32 to index
    %c0_221 = arith.constant 0 : index
    %414 = vector.load %arg9[%413, %c0_221] : memref<64x128xf32, #tpu.memory_space<vmem>>, vector<1x128xf32>
    tpu.vector_store %arg9[%413, %c0_221], %411 {strides = array<i32>} : memref<64x128xf32, #tpu.memory_space<vmem>>, vector<1x128xf32>,
    %415 = arith.index_cast %c6_i32_208 : i32 to index
    %c3_222 = arith.constant 3 : index
    %416 = memref.load %arg1[%415, %c3_222] : memref<8x8xi32, #tpu.memory_space<smem>>
    %417 = arith.index_cast %416 : i32 to index
    %c0_223 = arith.constant 0 : index
    %418 = vector.load %arg2[%417, %c0_223] : memref<64x128xf32, #tpu.memory_space<vmem>>, vector<1x128xf32>
    %c3_i32_224 = arith.constant 3 : i32
    %419 = arith.addi %393, %c3_i32_224 : i32
    %420 = arith.index_cast %419 : i32 to index
    %c0_225 = arith.constant 0 : index
    %421 = vector.load %arg9[%420, %c0_225] : memref<64x128xf32, #tpu.memory_space<vmem>>, vector<1x128xf32>
    tpu.vector_store %arg9[%420, %c0_225], %418 {strides = array<i32>} : memref<64x128xf32, #tpu.memory_space<vmem>>, vector<1x128xf32>,
    %422 = arith.index_cast %c6_i32_208 : i32 to index
    %c4_226 = arith.constant 4 : index
    %423 = memref.load %arg1[%422, %c4_226] : memref<8x8xi32, #tpu.memory_space<smem>>
    %424 = arith.index_cast %423 : i32 to index
    %c0_227 = arith.constant 0 : index
    %425 = vector.load %arg2[%424, %c0_227] : memref<64x128xf32, #tpu.memory_space<vmem>>, vector<1x128xf32>
    %c4_i32_228 = arith.constant 4 : i32
    %426 = arith.addi %393, %c4_i32_228 : i32
    %427 = arith.index_cast %426 : i32 to index
    %c0_229 = arith.constant 0 : index
    %428 = vector.load %arg9[%427, %c0_229] : memref<64x128xf32, #tpu.memory_space<vmem>>, vector<1x128xf32>
    tpu.vector_store %arg9[%427, %c0_229], %425 {strides = array<i32>} : memref<64x128xf32, #tpu.memory_space<vmem>>, vector<1x128xf32>,
    %429 = arith.index_cast %c6_i32_208 : i32 to index
    %c5_230 = arith.constant 5 : index
    %430 = memref.load %arg1[%429, %c5_230] : memref<8x8xi32, #tpu.memory_space<smem>>
    %431 = arith.index_cast %430 : i32 to index
    %c0_231 = arith.constant 0 : index
    %432 = vector.load %arg2[%431, %c0_231] : memref<64x128xf32, #tpu.memory_space<vmem>>, vector<1x128xf32>
    %c5_i32_232 = arith.constant 5 : i32
    %433 = arith.addi %393, %c5_i32_232 : i32
    %434 = arith.index_cast %433 : i32 to index
    %c0_233 = arith.constant 0 : index
    %435 = vector.load %arg9[%434, %c0_233] : memref<64x128xf32, #tpu.memory_space<vmem>>, vector<1x128xf32>
    tpu.vector_store %arg9[%434, %c0_233], %432 {strides = array<i32>} : memref<64x128xf32, #tpu.memory_space<vmem>>, vector<1x128xf32>,
    %436 = arith.index_cast %c6_i32_208 : i32 to index
    %c6_234 = arith.constant 6 : index
    %437 = memref.load %arg1[%436, %c6_234] : memref<8x8xi32, #tpu.memory_space<smem>>
    %438 = arith.index_cast %437 : i32 to index
    %c0_235 = arith.constant 0 : index
    %439 = vector.load %arg2[%438, %c0_235] : memref<64x128xf32, #tpu.memory_space<vmem>>, vector<1x128xf32>
    %c6_i32_236 = arith.constant 6 : i32
    %440 = arith.addi %393, %c6_i32_236 : i32
    %441 = arith.index_cast %440 : i32 to index
    %c0_237 = arith.constant 0 : index
    %442 = vector.load %arg9[%441, %c0_237] : memref<64x128xf32, #tpu.memory_space<vmem>>, vector<1x128xf32>
    tpu.vector_store %arg9[%441, %c0_237], %439 {strides = array<i32>} : memref<64x128xf32, #tpu.memory_space<vmem>>, vector<1x128xf32>,
    %443 = arith.index_cast %c6_i32_208 : i32 to index
    %c7_238 = arith.constant 7 : index
    %444 = memref.load %arg1[%443, %c7_238] : memref<8x8xi32, #tpu.memory_space<smem>>
    %445 = arith.index_cast %444 : i32 to index
    %c0_239 = arith.constant 0 : index
    %446 = vector.load %arg2[%445, %c0_239] : memref<64x128xf32, #tpu.memory_space<vmem>>, vector<1x128xf32>
    %c7_i32_240 = arith.constant 7 : i32
    %447 = arith.addi %393, %c7_i32_240 : i32
    %448 = arith.index_cast %447 : i32 to index
    %c0_241 = arith.constant 0 : index
    %449 = vector.load %arg9[%448, %c0_241] : memref<64x128xf32, #tpu.memory_space<vmem>>, vector<1x128xf32>
    tpu.vector_store %arg9[%448, %c0_241], %446 {strides = array<i32>} : memref<64x128xf32, #tpu.memory_space<vmem>>, vector<1x128xf32>,
    %450 = arith.index_cast %393 : i32 to index
    %c0_242 = arith.constant 0 : index
    %451 = vector.load %arg9[%450, %c0_242] : memref<64x128xf32, #tpu.memory_space<vmem>>, vector<8x128xf32>
    %cst_243 = arith.constant dense<0.000000e+00> : vector<8x128xf32>
    %452 = tpu.matmul %389, %0, %cst_243 {dimension_numbers = #tpu.dot_dimension_numbers<[1], [0], [0], [1], [0, 0, 1, 1], [], []>} : vector<8x128xf32>, vector<128x128xf32>, vector<8x128xf32> -> vector<8x128xf32>
    %453 = arith.addf %451, %452 : vector<8x128xf32>
    %454 = math.tanh %453 : vector<8x128xf32>
    %455 = arith.index_cast %393 : i32 to index
    %c0_244 = arith.constant 0 : index
    %456 = vector.load %arg9[%455, %c0_244] : memref<64x128xf32, #tpu.memory_space<vmem>>, vector<8x128xf32>
    tpu.vector_store %arg9[%455, %c0_244], %454 {strides = array<i32>} : memref<64x128xf32, #tpu.memory_space<vmem>>, vector<8x128xf32>,
    %c7_i32_245 = arith.constant 7 : i32
    %c8_i32_246 = arith.constant 8 : i32
    %457 = arith.muli %c7_i32_245, %c8_i32_246 : i32
    %458 = tpu.assume_multiple %457, 8 : i32
    %459 = arith.index_cast %c7_i32_245 : i32 to index
    %c0_247 = arith.constant 0 : index
    %460 = memref.load %arg1[%459, %c0_247] : memref<8x8xi32, #tpu.memory_space<smem>>
    %461 = arith.index_cast %460 : i32 to index
    %c0_248 = arith.constant 0 : index
    %462 = vector.load %arg2[%461, %c0_248] : memref<64x128xf32, #tpu.memory_space<vmem>>, vector<1x128xf32>
    %c0_i32_249 = arith.constant 0 : i32
    %463 = arith.addi %458, %c0_i32_249 : i32
    %464 = arith.index_cast %463 : i32 to index
    %c0_250 = arith.constant 0 : index
    %465 = vector.load %arg9[%464, %c0_250] : memref<64x128xf32, #tpu.memory_space<vmem>>, vector<1x128xf32>
    tpu.vector_store %arg9[%464, %c0_250], %462 {strides = array<i32>} : memref<64x128xf32, #tpu.memory_space<vmem>>, vector<1x128xf32>,
    %466 = arith.index_cast %c7_i32_245 : i32 to index
    %c1_251 = arith.constant 1 : index
    %467 = memref.load %arg1[%466, %c1_251] : memref<8x8xi32, #tpu.memory_space<smem>>
    %468 = arith.index_cast %467 : i32 to index
    %c0_252 = arith.constant 0 : index
    %469 = vector.load %arg2[%468, %c0_252] : memref<64x128xf32, #tpu.memory_space<vmem>>, vector<1x128xf32>
    %c1_i32_253 = arith.constant 1 : i32
    %470 = arith.addi %458, %c1_i32_253 : i32
    %471 = arith.index_cast %470 : i32 to index
    %c0_254 = arith.constant 0 : index
    %472 = vector.load %arg9[%471, %c0_254] : memref<64x128xf32, #tpu.memory_space<vmem>>, vector<1x128xf32>
    tpu.vector_store %arg9[%471, %c0_254], %469 {strides = array<i32>} : memref<64x128xf32, #tpu.memory_space<vmem>>, vector<1x128xf32>,
    %473 = arith.index_cast %c7_i32_245 : i32 to index
    %c2_255 = arith.constant 2 : index
    %474 = memref.load %arg1[%473, %c2_255] : memref<8x8xi32, #tpu.memory_space<smem>>
    %475 = arith.index_cast %474 : i32 to index
    %c0_256 = arith.constant 0 : index
    %476 = vector.load %arg2[%475, %c0_256] : memref<64x128xf32, #tpu.memory_space<vmem>>, vector<1x128xf32>
    %c2_i32_257 = arith.constant 2 : i32
    %477 = arith.addi %458, %c2_i32_257 : i32
    %478 = arith.index_cast %477 : i32 to index
    %c0_258 = arith.constant 0 : index
    %479 = vector.load %arg9[%478, %c0_258] : memref<64x128xf32, #tpu.memory_space<vmem>>, vector<1x128xf32>
    tpu.vector_store %arg9[%478, %c0_258], %476 {strides = array<i32>} : memref<64x128xf32, #tpu.memory_space<vmem>>, vector<1x128xf32>,
    %480 = arith.index_cast %c7_i32_245 : i32 to index
    %c3_259 = arith.constant 3 : index
    %481 = memref.load %arg1[%480, %c3_259] : memref<8x8xi32, #tpu.memory_space<smem>>
    %482 = arith.index_cast %481 : i32 to index
    %c0_260 = arith.constant 0 : index
    %483 = vector.load %arg2[%482, %c0_260] : memref<64x128xf32, #tpu.memory_space<vmem>>, vector<1x128xf32>
    %c3_i32_261 = arith.constant 3 : i32
    %484 = arith.addi %458, %c3_i32_261 : i32
    %485 = arith.index_cast %484 : i32 to index
    %c0_262 = arith.constant 0 : index
    %486 = vector.load %arg9[%485, %c0_262] : memref<64x128xf32, #tpu.memory_space<vmem>>, vector<1x128xf32>
    tpu.vector_store %arg9[%485, %c0_262], %483 {strides = array<i32>} : memref<64x128xf32, #tpu.memory_space<vmem>>, vector<1x128xf32>,
    %487 = arith.index_cast %c7_i32_245 : i32 to index
    %c4_263 = arith.constant 4 : index
    %488 = memref.load %arg1[%487, %c4_263] : memref<8x8xi32, #tpu.memory_space<smem>>
    %489 = arith.index_cast %488 : i32 to index
    %c0_264 = arith.constant 0 : index
    %490 = vector.load %arg2[%489, %c0_264] : memref<64x128xf32, #tpu.memory_space<vmem>>, vector<1x128xf32>
    %c4_i32_265 = arith.constant 4 : i32
    %491 = arith.addi %458, %c4_i32_265 : i32
    %492 = arith.index_cast %491 : i32 to index
    %c0_266 = arith.constant 0 : index
    %493 = vector.load %arg9[%492, %c0_266] : memref<64x128xf32, #tpu.memory_space<vmem>>, vector<1x128xf32>
    tpu.vector_store %arg9[%492, %c0_266], %490 {strides = array<i32>} : memref<64x128xf32, #tpu.memory_space<vmem>>, vector<1x128xf32>,
    %494 = arith.index_cast %c7_i32_245 : i32 to index
    %c5_267 = arith.constant 5 : index
    %495 = memref.load %arg1[%494, %c5_267] : memref<8x8xi32, #tpu.memory_space<smem>>
    %496 = arith.index_cast %495 : i32 to index
    %c0_268 = arith.constant 0 : index
    %497 = vector.load %arg2[%496, %c0_268] : memref<64x128xf32, #tpu.memory_space<vmem>>, vector<1x128xf32>
    %c5_i32_269 = arith.constant 5 : i32
    %498 = arith.addi %458, %c5_i32_269 : i32
    %499 = arith.index_cast %498 : i32 to index
    %c0_270 = arith.constant 0 : index
    %500 = vector.load %arg9[%499, %c0_270] : memref<64x128xf32, #tpu.memory_space<vmem>>, vector<1x128xf32>
    tpu.vector_store %arg9[%499, %c0_270], %497 {strides = array<i32>} : memref<64x128xf32, #tpu.memory_space<vmem>>, vector<1x128xf32>,
    %501 = arith.index_cast %c7_i32_245 : i32 to index
    %c6_271 = arith.constant 6 : index
    %502 = memref.load %arg1[%501, %c6_271] : memref<8x8xi32, #tpu.memory_space<smem>>
    %503 = arith.index_cast %502 : i32 to index
    %c0_272 = arith.constant 0 : index
    %504 = vector.load %arg2[%503, %c0_272] : memref<64x128xf32, #tpu.memory_space<vmem>>, vector<1x128xf32>
    %c6_i32_273 = arith.constant 6 : i32
    %505 = arith.addi %458, %c6_i32_273 : i32
    %506 = arith.index_cast %505 : i32 to index
    %c0_274 = arith.constant 0 : index
    %507 = vector.load %arg9[%506, %c0_274] : memref<64x128xf32, #tpu.memory_space<vmem>>, vector<1x128xf32>
    tpu.vector_store %arg9[%506, %c0_274], %504 {strides = array<i32>} : memref<64x128xf32, #tpu.memory_space<vmem>>, vector<1x128xf32>,
    %508 = arith.index_cast %c7_i32_245 : i32 to index
    %c7_275 = arith.constant 7 : index
    %509 = memref.load %arg1[%508, %c7_275] : memref<8x8xi32, #tpu.memory_space<smem>>
    %510 = arith.index_cast %509 : i32 to index
    %c0_276 = arith.constant 0 : index
    %511 = vector.load %arg2[%510, %c0_276] : memref<64x128xf32, #tpu.memory_space<vmem>>, vector<1x128xf32>
    %c7_i32_277 = arith.constant 7 : i32
    %512 = arith.addi %458, %c7_i32_277 : i32
    %513 = arith.index_cast %512 : i32 to index
    %c0_278 = arith.constant 0 : index
    %514 = vector.load %arg9[%513, %c0_278] : memref<64x128xf32, #tpu.memory_space<vmem>>, vector<1x128xf32>
    tpu.vector_store %arg9[%513, %c0_278], %511 {strides = array<i32>} : memref<64x128xf32, #tpu.memory_space<vmem>>, vector<1x128xf32>,
    %515 = arith.index_cast %458 : i32 to index
    %c0_279 = arith.constant 0 : index
    %516 = vector.load %arg9[%515, %c0_279] : memref<64x128xf32, #tpu.memory_space<vmem>>, vector<8x128xf32>
    %cst_280 = arith.constant dense<0.000000e+00> : vector<8x128xf32>
    %517 = tpu.matmul %454, %0, %cst_280 {dimension_numbers = #tpu.dot_dimension_numbers<[1], [0], [0], [1], [0, 0, 1, 1], [], []>} : vector<8x128xf32>, vector<128x128xf32>, vector<8x128xf32> -> vector<8x128xf32>
    %518 = arith.addf %516, %517 : vector<8x128xf32>
    %519 = math.tanh %518 : vector<8x128xf32>
    %520 = arith.index_cast %458 : i32 to index
    %c0_281 = arith.constant 0 : index
    %521 = vector.load %arg9[%520, %c0_281] : memref<64x128xf32, #tpu.memory_space<vmem>>, vector<8x128xf32>
    tpu.vector_store %arg9[%520, %c0_281], %519 {strides = array<i32>} : memref<64x128xf32, #tpu.memory_space<vmem>>, vector<8x128xf32>,
    %c8_i32_282 = arith.constant 8 : i32
    %c0_283 = arith.constant 0 : index
    %c0_284 = arith.constant 0 : index
    %522 = vector.load %arg8[%c0_283, %c0_284] : memref<8x128xf32, #tpu.memory_space<vmem>>, vector<8x128xf32>
    tpu.vector_store %arg8[%c0_283, %c0_284], %519 {strides = array<i32>} : memref<8x128xf32, #tpu.memory_space<vmem>>, vector<8x128xf32>,
    %c0_285 = arith.constant 0 : index
    %c0_286 = arith.constant 0 : index
    %523 = vector.load %arg9[%c0_285, %c0_286] : memref<64x128xf32, #tpu.memory_space<vmem>>, vector<64x128xf32>
    %c0_287 = arith.constant 0 : index
    %c0_288 = arith.constant 0 : index
    %524 = vector.load %arg5[%c0_287, %c0_288] : memref<128x128xf32, #tpu.memory_space<vmem>>, vector<128x128xf32>
    %cst_289 = arith.constant dense<0.000000e+00> : vector<64x128xf32>
    %525 = tpu.matmul %523, %524, %cst_289 {dimension_numbers = #tpu.dot_dimension_numbers<[1], [0], [0], [1], [0, 0, 1, 1], [], []>} : vector<64x128xf32>, vector<128x128xf32>, vector<64x128xf32> -> vector<64x128xf32>
    %c0_290 = arith.constant 0 : index
    %c0_291 = arith.constant 0 : index
    %526 = vector.load %arg6[%c0_290, %c0_291] : memref<1x128xf32, #tpu.memory_space<vmem>>, vector<1x128xf32>
    %527 = vector.broadcast %526 : vector<1x128xf32> to vector<64x128xf32>
    %528 = arith.addf %525, %527 : vector<64x128xf32>
    %c0_292 = arith.constant 0 : index
    %c0_293 = arith.constant 0 : index
    %529 = vector.load %arg7[%c0_292, %c0_293] : memref<64x128xf32, #tpu.memory_space<vmem>>, vector<64x128xf32>
    tpu.vector_store %arg7[%c0_292, %c0_293], %528 {strides = array<i32>} : memref<64x128xf32, #tpu.memory_space<vmem>>, vector<64x128xf32>,
    return
  }
  func.func @transform_0(%arg0: i32, %arg1: memref<8x8xi32, #tpu.memory_space<smem>>) -> (i32, i32) {
    %c0_i32 = arith.constant 0 : i32
    %c0_i32_0 = arith.constant 0 : i32
    %c0_i32_1 = arith.constant 0 : i32
    return %c0_i32, %c0_i32_0 : i32, i32
  }
  func.func @transform_1(%arg0: i32, %arg1: memref<8x8xi32, #tpu.memory_space<smem>>) -> (i32, i32) {
    %c0_i32 = arith.constant 0 : i32
    %c0_i32_0 = arith.constant 0 : i32
    %c0_i32_1 = arith.constant 0 : i32
    return %c0_i32, %c0_i32_0 : i32, i32
  }
  func.func @transform_2(%arg0: i32, %arg1: memref<8x8xi32, #tpu.memory_space<smem>>) -> (i32, i32) {
    %c0_i32 = arith.constant 0 : i32
    %c0_i32_0 = arith.constant 0 : i32
    %c0_i32_1 = arith.constant 0 : i32
    return %c0_i32, %c0_i32_0 : i32, i32
  }
  func.func @transform_3(%arg0: i32, %arg1: memref<8x8xi32, #tpu.memory_space<smem>>) -> (i32, i32) {
    %c0_i32 = arith.constant 0 : i32
    %c0_i32_0 = arith.constant 0 : i32
    %c0_i32_1 = arith.constant 0 : i32
    return %c0_i32, %c0_i32_0 : i32, i32
  }
  func.func @transform_4(%arg0: i32, %arg1: memref<8x8xi32, #tpu.memory_space<smem>>) -> (i32, i32) {
    %c0_i32 = arith.constant 0 : i32
    %c0_i32_0 = arith.constant 0 : i32
    %c0_i32_1 = arith.constant 0 : i32
    return %c0_i32, %c0_i32_0 : i32, i32
  }
  func.func @transform_5(%arg0: i32, %arg1: memref<8x8xi32, #tpu.memory_space<smem>>) -> (i32, i32) {
    %c0_i32 = arith.constant 0 : i32
    %c0_i32_0 = arith.constant 0 : i32
    %c0_i32_1 = arith.constant 0 : i32
    return %c0_i32, %c0_i32_0 : i32, i32
  }
  func.func @transform_6(%arg0: i32, %arg1: memref<8x8xi32, #tpu.memory_space<smem>>) -> (i32, i32) {
    %c0_i32 = arith.constant 0 : i32
    %c0_i32_0 = arith.constant 0 : i32
    %c0_i32_1 = arith.constant 0 : i32
    return %c0_i32, %c0_i32_0 : i32, i32
  }
}

</mosaic_0001>

<llo_original>
// kernel: tpu_custom_call.1
$region0: #{tpu_custom_call.1}
  #allocation0 [shape = 'u32[]', space=smem, size = 0x4, offset = 0x4, fixed_abs, tag = 'smem constant byte address 0x4 - core index']
  #allocation1 [shape = 'u32[72,128]{1,0:T(1,128)}', space=vmem, size = 0x9000, scoped, tag = 'internal scratch']
  #allocation2 [shape = 'f32[64,128]{1,0:T(8,128)}', space=vmem, size = 0x8000, scoped, tag = 'scratch operand']
  #allocation3 [shape = 's32[1]{0}', space=sflag, size = 0x4, scoped, tag = 'scoped memory for tpu_custom_call.1']
  #allocation4 [shape = 'u8[4096]{0}', space=smem, size = 0x1000, scoped, tag = 'prefetched SMEM operand 0']
  %s0 = inlined_call_operand.hbm [shape: s32[8,8], index: 0, kind: input, shape index: {}]
  %s1 = inlined_call_operand.hbm [shape: f32[64,128], index: 1, kind: input, shape index: {}]
  %s2 = inlined_call_operand.hbm [shape: f32[8,128], index: 2, kind: input, shape index: {}]
  %s3 = inlined_call_operand.hbm [shape: f32[128,128], index: 3, kind: input, shape index: {}]
  %s4 = inlined_call_operand.hbm [shape: f32[128,128], index: 4, kind: input, shape index: {}]
  %s5 = inlined_call_operand.vmem [shape: f32[1,128], index: 5, kind: input, shape index: {}]
  %s6 = inlined_call_operand.hbm [shape: f32[64,128], index: 6, kind: output, shape index: {0}]
  %s7 = inlined_call_operand.hbm [shape: f32[8,128], index: 7, kind: output, shape index: {1}]
  %8 = xla_tuple %s6, %s7
  %s9 = sld [smem:[#allocation0]]
  $region54: #{tpu_custom_call.1} parent=0
    _
  %s11 = ssub.s32 1, %s9
  %s12 = scalar_select 0, %s11, %s9
  %s14 = sshll.u32 %s0, 4
  %s15 = int_to_ptr.hbm [resolvable:$true] %s14
  %17 = dma.hbm_to_smem %s15, 128, [#allocation4], [#allocation3]
  %19 = dma.done [#allocation3], 128
  %20 = sfence
  $region1: #{tpu_custom_call.1} parent=0
    #allocation5 [shape = 'u8[32768]{0}', space=vmem, size = 0x8000, scoped, tag = 'input window, operand 1, single buffered']
    #allocation6 [shape = 's32[1]{0}', space=sflag, size = 0x4, scoped, tag = 'scoped memory for tpu_custom_call.1']
    #allocation7 [shape = 's32[1]{0}', space=sflag, size = 0x4, scoped, tag = 'scoped memory for tpu_custom_call.1']
    #allocation8 [shape = 'u8[4096]{0}', space=vmem, size = 0x1000, scoped, tag = 'input window, operand 2, single buffered']
    #allocation9 [shape = 's32[1]{0}', space=sflag, size = 0x4, scoped, tag = 'scoped memory for tpu_custom_call.1']
    #allocation10 [shape = 'u8[65536]{0}', space=vmem, size = 0x10000, scoped, tag = 'input window, operand 3, single buffered']
    #allocation11 [shape = 'u8[65536]{0}', space=vmem, size = 0x10000, scoped, tag = 'input window, operand 4, single buffered']
    #allocation12 [shape = 's32[1]{0}', space=sflag, size = 0x4, scoped, tag = 'scoped memory for tpu_custom_call.1']
    #allocation13 [shape = 'u8[32768]{0}', space=vmem, size = 0x8000, scoped, tag = 'output window, operand 0, single buffered']
    #allocation14 [shape = 'u8[4096]{0}', space=vmem, size = 0x1000, scoped, tag = 'output window, operand 1, single buffered']
    #allocation15 [shape = 's32[1]{0}', space=sflag, size = 0x4, scoped, tag = 'scoped memory for tpu_custom_call.1']
    %21 = vsyncpa [#allocation6], 0
    %22 = vsyncpa [#allocation9], 0
    %23 = vsyncpa [#allocation12], 0
    %24 = vsyncpa [#allocation7], 0
    %25 = vsyncpa [#allocation15], 0
    // Predicated region
    $region2: #{tpu_custom_call.1} parent=1 // pred_check
      _
    $region3: #{tpu_custom_call.1} parent=1 // pred_check_branch
      %27 = sbr.rel (0) target = $region5
    $region4: #{tpu_custom_call.1} parent=1 // pred_region
      %29 = vsyncadd [#allocation6], 0
      %s30 = sshll.u32 %s1, 4
      %s31 = int_to_ptr.hbm [resolvable:$true] %s30
      %s32 = sshll.u32 [#allocation5], 4
      %s33 = int_to_ptr.vmem [resolvable:$true] %s32
      %38 = dma.hbm_to_vmem [thread:$0]  %s31, 1024, %s33, [#allocation6], 128, 128, 8
    $region5: #{tpu_custom_call.1} parent=1 // pred_fallthru
      _
    // Predicated region
    $region6: #{tpu_custom_call.1} parent=1 // pred_check
      _
    $region7: #{tpu_custom_call.1} parent=1 // pred_check_branch
      %40 = sbr.rel (0) target = $region9
    $region8: #{tpu_custom_call.1} parent=1 // pred_region
      %42 = vsyncadd [#allocation9], 0
      %s44 = sshll.u32 %s2, 4
      %s45 = int_to_ptr.hbm [resolvable:$true] %s44
      %s46 = sshll.u32 [#allocation8], 4
      %s47 = int_to_ptr.vmem [resolvable:$true] %s46
      %49 = dma.hbm_to_vmem [thread:$0]  %s45, 128, %s47, [#allocation9]
    $region9: #{tpu_custom_call.1} parent=1 // pred_fallthru
      _
    // Predicated region
    $region10: #{tpu_custom_call.1} parent=1 // pred_check
      _
    $region11: #{tpu_custom_call.1} parent=1 // pred_check_branch
      %51 = sbr.rel (0) target = $region13
    $region12: #{tpu_custom_call.1} parent=1 // pred_region
      %53 = vsyncadd [#allocation9], 0
      %s54 = sshll.u32 %s3, 4
      %s55 = int_to_ptr.hbm [resolvable:$true] %s54
      %s56 = sshll.u32 [#allocation10], 4
      %s57 = int_to_ptr.vmem [resolvable:$true] %s56
      %62 = dma.hbm_to_vmem [thread:$0]  %s55, 2048, %s57, [#allocation9], 128, 128, 8
    $region13: #{tpu_custom_call.1} parent=1 // pred_fallthru
      _
    // Predicated region
    $region14: #{tpu_custom_call.1} parent=1 // pred_check
      _
    $region15: #{tpu_custom_call.1} parent=1 // pred_check_branch
      %64 = sbr.rel (0) target = $region17
    $region16: #{tpu_custom_call.1} parent=1 // pred_region
      %66 = vsyncadd [#allocation12], 0
      %s67 = sshll.u32 %s4, 4
      %s68 = int_to_ptr.hbm [resolvable:$true] %s67
      %s69 = sshll.u32 [#allocation11], 4
      %s70 = int_to_ptr.vmem [resolvable:$true] %s69
      %75 = dma.hbm_to_vmem [thread:$0]  %s68, 2048, %s70, [#allocation12], 128, 128, 8
    $region17: #{tpu_custom_call.1} parent=1 // pred_fallthru
      _
    // Predicated region
    $region18: #{tpu_custom_call.1} parent=1 // pred_check
      _
    $region19: #{tpu_custom_call.1} parent=1 // pred_check_branch
      %77 = sbr.rel (0) target = $region21
    $region20: #{tpu_custom_call.1} parent=1 // pred_region
      _
    $region21: #{tpu_custom_call.1} parent=1 // pred_fallthru
      _
    // Predicated region
    $region22: #{tpu_custom_call.1} parent=1 // pred_check
      _
    $region23: #{tpu_custom_call.1} parent=1 // pred_check_branch
      %79 = sbr.rel (0) target = $region25
    $region24: #{tpu_custom_call.1} parent=1 // pred_region
      %81 = dma.done [#allocation6], 1024
    $region25: #{tpu_custom_call.1} parent=1 // pred_fallthru
      _
    // Predicated region
    $region26: #{tpu_custom_call.1} parent=1 // pred_check
      _
    $region27: #{tpu_custom_call.1} parent=1 // pred_check_branch
      %83 = sbr.rel (0) target = $region29
    $region28: #{tpu_custom_call.1} parent=1 // pred_region
      %85 = dma.done [#allocation9], 128
    $region29: #{tpu_custom_call.1} parent=1 // pred_fallthru
      _
    // Predicated region
    $region30: #{tpu_custom_call.1} parent=1 // pred_check
      _
    $region31: #{tpu_custom_call.1} parent=1 // pred_check_branch
      %87 = sbr.rel (0) target = $region33
    $region32: #{tpu_custom_call.1} parent=1 // pred_region
      %89 = dma.done [#allocation9], 2048
    $region33: #{tpu_custom_call.1} parent=1 // pred_fallthru
      _
    // Predicated region
    $region34: #{tpu_custom_call.1} parent=1 // pred_check
      _
    $region35: #{tpu_custom_call.1} parent=1 // pred_check_branch
      %91 = sbr.rel (0) target = $region37
    $region36: #{tpu_custom_call.1} parent=1 // pred_region
      %93 = dma.done [#allocation12], 2048
    $region37: #{tpu_custom_call.1} parent=1 // pred_fallthru
      _
    %v94 = vld [vmem:[#allocation10] sm:$0xff]
    %v95 = vld [vmem:[#allocation10 + $0x8] sm:$0xff]
    %v96 = vld [vmem:[#allocation10 + $0x10] sm:$0xff]
    %v97 = vld [vmem:[#allocation10 + $0x18] sm:$0xff]
    %v98 = vld [vmem:[#allocation10 + $0x20] sm:$0xff]
    %v99 = vld [vmem:[#allocation10 + $0x28] sm:$0xff]
    %v100 = vld [vmem:[#allocation10 + $0x30] sm:$0xff]
    %v101 = vld [vmem:[#allocation10 + $0x38] sm:$0xff]
    %v102 = vld [vmem:[#allocation10 + $0x40] sm:$0xff]
    %v103 = vld [vmem:[#allocation10 + $0x48] sm:$0xff]
    %v104 = vld [vmem:[#allocation10 + $0x50] sm:$0xff]
    %v105 = vld [vmem:[#allocation10 + $0x58] sm:$0xff]
    %v106 = vld [vmem:[#allocation10 + $0x60] sm:$0xff]
    %v107 = vld [vmem:[#allocation10 + $0x68] sm:$0xff]
    %v108 = vld [vmem:[#allocation10 + $0x70] sm:$0xff]
    %v109 = vld [vmem:[#allocation10 + $0x78] sm:$0xff]
    %v110 = vld [vmem:[#allocation8] sm:$0xff]
    %s111 = sld [smem:[#allocation4]]
    %s112 = scalar_lea.vmem [#allocation5], %s111
    %v113 = vld [vmem:[%s112] sm:$0x1]
    %114 = vst [vmem:[#allocation2] sm:$0x1] %v113
    %s115 = sld [smem:[#allocation4 + $0x1]]
    %s116 = scalar_lea.vmem [#allocation5], %s115
    %v117 = vld [vmem:[%s116] sm:$0x1]
    %s118 = sadd.s32 0, 1
    %s119 = scalar_lea.vmem [#allocation2], %s118
    %120 = vst [vmem:[%s119] sm:$0x1] %v117
    %s121 = sld [smem:[#allocation4 + $0x2]]
    %s122 = scalar_lea.vmem [#allocation5], %s121
    %v123 = vld [vmem:[%s122] sm:$0x1]
    %s124 = sadd.s32 0, 2
    %s125 = scalar_lea.vmem [#allocation2], %s124
    %126 = vst [vmem:[%s125] sm:$0x1] %v123
    %s127 = sld [smem:[#allocation4 + $0x3]]
    %s128 = scalar_lea.vmem [#allocation5], %s127
    %v129 = vld [vmem:[%s128] sm:$0x1]
    %s130 = sadd.s32 0, 3
    %s131 = scalar_lea.vmem [#allocation2], %s130
    %132 = vst [vmem:[%s131] sm:$0x1] %v129
    %s133 = sld [smem:[#allocation4 + $0x4]]
    %s134 = scalar_lea.vmem [#allocation5], %s133
    %v135 = vld [vmem:[%s134] sm:$0x1]
    %s136 = sadd.s32 0, 4
    %s137 = scalar_lea.vmem [#allocation2], %s136
    %138 = vst [vmem:[%s137] sm:$0x1] %v135
    %s139 = sld [smem:[#allocation4 + $0x5]]
    %s140 = scalar_lea.vmem [#allocation5], %s139
    %v141 = vld [vmem:[%s140] sm:$0x1]
    %s142 = sadd.s32 0, 5
    %s143 = scalar_lea.vmem [#allocation2], %s142
    %144 = vst [vmem:[%s143] sm:$0x1] %v141
    %s145 = sld [smem:[#allocation4 + $0x6]]
    %s146 = scalar_lea.vmem [#allocation5], %s145
    %v147 = vld [vmem:[%s146] sm:$0x1]
    %s148 = sadd.s32 0, 6
    %s149 = scalar_lea.vmem [#allocation2], %s148
    %150 = vst [vmem:[%s149] sm:$0x1] %v147
    %s151 = sld [smem:[#allocation4 + $0x7]]
    %s152 = scalar_lea.vmem [#allocation5], %s151
    %v153 = vld [vmem:[%s152] sm:$0x1]
    %s154 = sadd.s32 0, 7
    %s155 = scalar_lea.vmem [#allocation2], %s154
    %156 = vst [vmem:[%s155] sm:$0x1] %v153
    %v157 = vld [vmem:[#allocation2] sm:$0xff]
    %158 = vmatpush.msra.mxu0 %v109
    %159 = vmatpush.msra.mxu0 %v108
    %160 = vmatpush.msra.mxu0 %v107
    %161 = vmatpush.msra.mxu0 %v106
    %162 = vmatpush.msra.mxu0 %v105
    %163 = vmatpush.msra.mxu0 %v104
    %164 = vmatpush.msra.mxu0 %v103
    %165 = vmatpush.msra.mxu0 %v102
    %166 = vmatpush.msra.mxu0 %v101
    %167 = vmatpush.msra.mxu0 %v100
    %168 = vmatpush.msra.mxu0 %v99
    %169 = vmatpush.msra.mxu0 %v98
    %170 = vmatpush.msra.mxu0 %v97
    %171 = vmatpush.msra.mxu0 %v96
    %172 = vmatpush.msra.mxu0 %v95
    %173 = vmatpush.msra.mxu0 %v94
    %174 = vmatmul.f32.gmra.mxu0 %v110
    %v175 = vpop.f32.mrf.mxu0
    %v176 = vadd.f32 0.0, %v175
    %177 = vdwg.mxu0
    %v178 = vadd.f32 %v157, %v176
    %v179 = vtanh.pop %v178
    %180 = vst [vmem:[#allocation2] sm:$0xff] %v179
    %s181 = sld [smem:[#allocation4 + $0x80]]
    %s182 = scalar_lea.vmem [#allocation5], %s181
    %v183 = vld [vmem:[%s182] sm:$0x1]
    %s184 = scalar_lea.vmem [#allocation2], 8
    %185 = vst [vmem:[%s184] sm:$0x1] %v183
    %s186 = sld [smem:[#allocation4 + $0x81]]
    %s187 = scalar_lea.vmem [#allocation5], %s186
    %v188 = vld [vmem:[%s187] sm:$0x1]
    %s189 = sadd.s32 8, 1
    %s190 = scalar_lea.vmem [#allocation2], %s189
    %191 = vst [vmem:[%s190] sm:$0x1] %v188
    %s192 = sld [smem:[#allocation4 + $0x82]]
    %s193 = scalar_lea.vmem [#allocation5], %s192
    %v194 = vld [vmem:[%s193] sm:$0x1]
    %s195 = sadd.s32 8, 2
    %s196 = scalar_lea.vmem [#allocation2], %s195
    %197 = vst [vmem:[%s196] sm:$0x1] %v194
    %s198 = sld [smem:[#allocation4 + $0x83]]
    %s199 = scalar_lea.vmem [#allocation5], %s198
    %v200 = vld [vmem:[%s199] sm:$0x1]
    %s201 = sadd.s32 8, 3
    %s202 = scalar_lea.vmem [#allocation2], %s201
    %203 = vst [vmem:[%s202] sm:$0x1] %v200
    %s204 = sld [smem:[#allocation4 + $0x84]]
    %s205 = scalar_lea.vmem [#allocation5], %s204
    %v206 = vld [vmem:[%s205] sm:$0x1]
    %s207 = sadd.s32 8, 4
    %s208 = scalar_lea.vmem [#allocation2], %s207
    %209 = vst [vmem:[%s208] sm:$0x1] %v206
    %s210 = sld [smem:[#allocation4 + $0x85]]
    %s211 = scalar_lea.vmem [#allocation5], %s210
    %v212 = vld [vmem:[%s211] sm:$0x1]
    %s213 = sadd.s32 8, 5
    %s214 = scalar_lea.vmem [#allocation2], %s213
    %215 = vst [vmem:[%s214] sm:$0x1] %v212
    %s216 = sld [smem:[#allocation4 + $0x86]]
    %s217 = scalar_lea.vmem [#allocation5], %s216
    %v218 = vld [vmem:[%s217] sm:$0x1]
    %s219 = sadd.s32 8, 6
    %s220 = scalar_lea.vmem [#allocation2], %s219
    %221 = vst [vmem:[%s220] sm:$0x1] %v218
    %s222 = sld [smem:[#allocation4 + $0x87]]
    %s223 = scalar_lea.vmem [#allocation5], %s222
    %v224 = vld [vmem:[%s223] sm:$0x1]
    %s225 = sadd.s32 8, 7
    %s226 = scalar_lea.vmem [#allocation2], %s225
    %227 = vst [vmem:[%s226] sm:$0x1] %v224
    %v228 = vld [vmem:[%s184] sm:$0xff]
    %229 = vmatpush.msra.mxu0 %v109
    %230 = vmatpush.msra.mxu0 %v108
    %231 = vmatpush.msra.mxu0 %v107
    %232 = vmatpush.msra.mxu0 %v106
    %233 = vmatpush.msra.mxu0 %v105
    %234 = vmatpush.msra.mxu0 %v104
    %235 = vmatpush.msra.mxu0 %v103
    %236 = vmatpush.msra.mxu0 %v102
    %237 = vmatpush.msra.mxu0 %v101
    %238 = vmatpush.msra.mxu0 %v100
    %239 = vmatpush.msra.mxu0 %v99
    %240 = vmatpush.msra.mxu0 %v98
    %241 = vmatpush.msra.mxu0 %v97
    %242 = vmatpush.msra.mxu0 %v96
    %243 = vmatpush.msra.mxu0 %v95
    %244 = vmatpush.msra.mxu0 %v94
    %245 = vmatmul.f32.gmra.mxu0 %v179
    %v246 = vpop.f32.mrf.mxu0
    %v247 = vadd.f32 0.0, %v246
    %248 = vdwg.mxu0
    %v249 = vadd.f32 %v228, %v247
    %v250 = vtanh.pop %v249
    %251 = vst [vmem:[%s184] sm:$0xff] %v250
    %s252 = sld [smem:[#allocation4 + $0x100]]
    %s253 = scalar_lea.vmem [#allocation5], %s252
    %v254 = vld [vmem:[%s253] sm:$0x1]
    %s255 = scalar_lea.vmem [#allocation2], 16
    %256 = vst [vmem:[%s255] sm:$0x1] %v254
    %s257 = sld [smem:[#allocation4 + $0x101]]
    %s258 = scalar_lea.vmem [#allocation5], %s257
    %v259 = vld [vmem:[%s258] sm:$0x1]
    %s260 = sadd.s32 16, 1
    %s261 = scalar_lea.vmem [#allocation2], %s260
    %262 = vst [vmem:[%s261] sm:$0x1] %v259
    %s263 = sld [smem:[#allocation4 + $0x102]]
    %s264 = scalar_lea.vmem [#allocation5], %s263
    %v265 = vld [vmem:[%s264] sm:$0x1]
    %s266 = sadd.s32 16, 2
    %s267 = scalar_lea.vmem [#allocation2], %s266
    %268 = vst [vmem:[%s267] sm:$0x1] %v265
    %s269 = sld [smem:[#allocation4 + $0x103]]
    %s270 = scalar_lea.vmem [#allocation5], %s269
    %v271 = vld [vmem:[%s270] sm:$0x1]
    %s272 = sadd.s32 16, 3
    %s273 = scalar_lea.vmem [#allocation2], %s272
    %274 = vst [vmem:[%s273] sm:$0x1] %v271
    %s275 = sld [smem:[#allocation4 + $0x104]]
    %s276 = scalar_lea.vmem [#allocation5], %s275
    %v277 = vld [vmem:[%s276] sm:$0x1]
    %s278 = sadd.s32 16, 4
    %s279 = scalar_lea.vmem [#allocation2], %s278
    %280 = vst [vmem:[%s279] sm:$0x1] %v277
    %s281 = sld [smem:[#allocation4 + $0x105]]
    %s282 = scalar_lea.vmem [#allocation5], %s281
    %v283 = vld [vmem:[%s282] sm:$0x1]
    %s284 = sadd.s32 16, 5
    %s285 = scalar_lea.vmem [#allocation2], %s284
    %286 = vst [vmem:[%s285] sm:$0x1] %v283
    %s287 = sld [smem:[#allocation4 + $0x106]]
    %s288 = scalar_lea.vmem [#allocation5], %s287
    %v289 = vld [vmem:[%s288] sm:$0x1]
    %s290 = sadd.s32 16, 6
    %s291 = scalar_lea.vmem [#allocation2], %s290
    %292 = vst [vmem:[%s291] sm:$0x1] %v289
    %s293 = sld [smem:[#allocation4 + $0x107]]
    %s294 = scalar_lea.vmem [#allocation5], %s293
    %v295 = vld [vmem:[%s294] sm:$0x1]
    %s296 = sadd.s32 16, 7
    %s297 = scalar_lea.vmem [#allocation2], %s296
    %298 = vst [vmem:[%s297] sm:$0x1] %v295
    %v299 = vld [vmem:[%s255] sm:$0xff]
    %300 = vmatpush.msra.mxu0 %v109
    %301 = vmatpush.msra.mxu0 %v108
    %302 = vmatpush.msra.mxu0 %v107
    %303 = vmatpush.msra.mxu0 %v106
    %304 = vmatpush.msra.mxu0 %v105
    %305 = vmatpush.msra.mxu0 %v104
    %306 = vmatpush.msra.mxu0 %v103
    %307 = vmatpush.msra.mxu0 %v102
    %308 = vmatpush.msra.mxu0 %v101
    %309 = vmatpush.msra.mxu0 %v100
    %310 = vmatpush.msra.mxu0 %v99
    %311 = vmatpush.msra.mxu0 %v98
    %312 = vmatpush.msra.mxu0 %v97
    %313 = vmatpush.msra.mxu0 %v96
    %314 = vmatpush.msra.mxu0 %v95
    %315 = vmatpush.msra.mxu0 %v94
    %316 = vmatmul.f32.gmra.mxu0 %v250
    %v317 = vpop.f32.mrf.mxu0
    %v318 = vadd.f32 0.0, %v317
    %319 = vdwg.mxu0
    %v320 = vadd.f32 %v299, %v318
    %v321 = vtanh.pop %v320
    %322 = vst [vmem:[%s255] sm:$0xff] %v321
    %s323 = sld [smem:[#allocation4 + $0x180]]
    %s324 = scalar_lea.vmem [#allocation5], %s323
    %v325 = vld [vmem:[%s324] sm:$0x1]
    %s326 = scalar_lea.vmem [#allocation2], 24
    %327 = vst [vmem:[%s326] sm:$0x1] %v325
    %s328 = sld [smem:[#allocation4 + $0x181]]
    %s329 = scalar_lea.vmem [#allocation5], %s328
    %v330 = vld [vmem:[%s329] sm:$0x1]
    %s331 = sadd.s32 24, 1
    %s332 = scalar_lea.vmem [#allocation2], %s331
    %333 = vst [vmem:[%s332] sm:$0x1] %v330
    %s334 = sld [smem:[#allocation4 + $0x182]]
    %s335 = scalar_lea.vmem [#allocation5], %s334
    %v336 = vld [vmem:[%s335] sm:$0x1]
    %s337 = sadd.s32 24, 2
    %s338 = scalar_lea.vmem [#allocation2], %s337
    %339 = vst [vmem:[%s338] sm:$0x1] %v336
    %s340 = sld [smem:[#allocation4 + $0x183]]
    %s341 = scalar_lea.vmem [#allocation5], %s340
    %v342 = vld [vmem:[%s341] sm:$0x1]
    %s343 = sadd.s32 24, 3
    %s344 = scalar_lea.vmem [#allocation2], %s343
    %345 = vst [vmem:[%s344] sm:$0x1] %v342
    %s346 = sld [smem:[#allocation4 + $0x184]]
    %s347 = scalar_lea.vmem [#allocation5], %s346
    %v348 = vld [vmem:[%s347] sm:$0x1]
    %s349 = sadd.s32 24, 4
    %s350 = scalar_lea.vmem [#allocation2], %s349
    %351 = vst [vmem:[%s350] sm:$0x1] %v348
    %s352 = sld [smem:[#allocation4 + $0x185]]
    %s353 = scalar_lea.vmem [#allocation5], %s352
    %v354 = vld [vmem:[%s353] sm:$0x1]
    %s355 = sadd.s32 24, 5
    %s356 = scalar_lea.vmem [#allocation2], %s355
    %357 = vst [vmem:[%s356] sm:$0x1] %v354
    %s358 = sld [smem:[#allocation4 + $0x186]]
    %s359 = scalar_lea.vmem [#allocation5], %s358
    %v360 = vld [vmem:[%s359] sm:$0x1]
    %s361 = sadd.s32 24, 6
    %s362 = scalar_lea.vmem [#allocation2], %s361
    %363 = vst [vmem:[%s362] sm:$0x1] %v360
    %s364 = sld [smem:[#allocation4 + $0x187]]
    %s365 = scalar_lea.vmem [#allocation5], %s364
    %v366 = vld [vmem:[%s365] sm:$0x1]
    %s367 = sadd.s32 24, 7
    %s368 = scalar_lea.vmem [#allocation2], %s367
    %369 = vst [vmem:[%s368] sm:$0x1] %v366
    %v370 = vld [vmem:[%s326] sm:$0xff]
    %371 = vmatpush.msra.mxu0 %v109
    %372 = vmatpush.msra.mxu0 %v108
    %373 = vmatpush.msra.mxu0 %v107
    %374 = vmatpush.msra.mxu0 %v106
    %375 = vmatpush.msra.mxu0 %v105
    %376 = vmatpush.msra.mxu0 %v104
    %377 = vmatpush.msra.mxu0 %v103
    %378 = vmatpush.msra.mxu0 %v102
    %379 = vmatpush.msra.mxu0 %v101
    %380 = vmatpush.msra.mxu0 %v100
    %381 = vmatpush.msra.mxu0 %v99
    %382 = vmatpush.msra.mxu0 %v98
    %383 = vmatpush.msra.mxu0 %v97
    %384 = vmatpush.msra.mxu0 %v96
    %385 = vmatpush.msra.mxu0 %v95
    %386 = vmatpush.msra.mxu0 %v94
    %387 = vmatmul.f32.gmra.mxu0 %v321
    %v388 = vpop.f32.mrf.mxu0
    %v389 = vadd.f32 0.0, %v388
    %390 = vdwg.mxu0
    %v391 = vadd.f32 %v370, %v389
    %v392 = vtanh.pop %v391
    %393 = vst [vmem:[%s326] sm:$0xff] %v392
    %s394 = sld [smem:[#allocation4 + $0x200]]
    %s395 = scalar_lea.vmem [#allocation5], %s394
    %v396 = vld [vmem:[%s395] sm:$0x1]
    %s397 = scalar_lea.vmem [#allocation2], 32
    %398 = vst [vmem:[%s397] sm:$0x1] %v396
    %s399 = sld [smem:[#allocation4 + $0x201]]
    %s400 = scalar_lea.vmem [#allocation5], %s399
    %v401 = vld [vmem:[%s400] sm:$0x1]
    %s402 = sadd.s32 32, 1
    %s403 = scalar_lea.vmem [#allocation2], %s402
    %404 = vst [vmem:[%s403] sm:$0x1] %v401
    %s405 = sld [smem:[#allocation4 + $0x202]]
    %s406 = scalar_lea.vmem [#allocation5], %s405
    %v407 = vld [vmem:[%s406] sm:$0x1]
    %s408 = sadd.s32 32, 2
    %s409 = scalar_lea.vmem [#allocation2], %s408
    %410 = vst [vmem:[%s409] sm:$0x1] %v407
    %s411 = sld [smem:[#allocation4 + $0x203]]
    %s412 = scalar_lea.vmem [#allocation5], %s411
    %v413 = vld [vmem:[%s412] sm:$0x1]
    %s414 = sadd.s32 32, 3
    %s415 = scalar_lea.vmem [#allocation2], %s414
    %416 = vst [vmem:[%s415] sm:$0x1] %v413
    %s417 = sld [smem:[#allocation4 + $0x204]]
    %s418 = scalar_lea.vmem [#allocation5], %s417
    %v419 = vld [vmem:[%s418] sm:$0x1]
    %s420 = sadd.s32 32, 4
    %s421 = scalar_lea.vmem [#allocation2], %s420
    %422 = vst [vmem:[%s421] sm:$0x1] %v419
    %s423 = sld [smem:[#allocation4 + $0x205]]
    %s424 = scalar_lea.vmem [#allocation5], %s423
    %v425 = vld [vmem:[%s424] sm:$0x1]
    %s426 = sadd.s32 32, 5
    %s427 = scalar_lea.vmem [#allocation2], %s426
    %428 = vst [vmem:[%s427] sm:$0x1] %v425
    %s429 = sld [smem:[#allocation4 + $0x206]]
    %s430 = scalar_lea.vmem [#allocation5], %s429
    %v431 = vld [vmem:[%s430] sm:$0x1]
    %s432 = sadd.s32 32, 6
    %s433 = scalar_lea.vmem [#allocation2], %s432
    %434 = vst [vmem:[%s433] sm:$0x1] %v431
    %s435 = sld [smem:[#allocation4 + $0x207]]
    %s436 = scalar_lea.vmem [#allocation5], %s435
    %v437 = vld [vmem:[%s436] sm:$0x1]
    %s438 = sadd.s32 32, 7
    %s439 = scalar_lea.vmem [#allocation2], %s438
    %440 = vst [vmem:[%s439] sm:$0x1] %v437
    %v441 = vld [vmem:[%s397] sm:$0xff]
    %442 = vmatpush.msra.mxu0 %v109
    %443 = vmatpush.msra.mxu0 %v108
    %444 = vmatpush.msra.mxu0 %v107
    %445 = vmatpush.msra.mxu0 %v106
    %446 = vmatpush.msra.mxu0 %v105
    %447 = vmatpush.msra.mxu0 %v104
    %448 = vmatpush.msra.mxu0 %v103
    %449 = vmatpush.msra.mxu0 %v102
    %450 = vmatpush.msra.mxu0 %v101
    %451 = vmatpush.msra.mxu0 %v100
    %452 = vmatpush.msra.mxu0 %v99
    %453 = vmatpush.msra.mxu0 %v98
    %454 = vmatpush.msra.mxu0 %v97
    %455 = vmatpush.msra.mxu0 %v96
    %456 = vmatpush.msra.mxu0 %v95
    %457 = vmatpush.msra.mxu0 %v94
    %458 = vmatmul.f32.gmra.mxu0 %v392
    %v459 = vpop.f32.mrf.mxu0
    %v460 = vadd.f32 0.0, %v459
    %461 = vdwg.mxu0
    %v462 = vadd.f32 %v441, %v460
    %v463 = vtanh.pop %v462
    %464 = vst [vmem:[%s397] sm:$0xff] %v463
    %s465 = sld [smem:[#allocation4 + $0x280]]
    %s466 = scalar_lea.vmem [#allocation5], %s465
    %v467 = vld [vmem:[%s466] sm:$0x1]
    %s468 = scalar_lea.vmem [#allocation2], 40
    %469 = vst [vmem:[%s468] sm:$0x1] %v467
    %s470 = sld [smem:[#allocation4 + $0x281]]
    %s471 = scalar_lea.vmem [#allocation5], %s470
    %v472 = vld [vmem:[%s471] sm:$0x1]
    %s473 = sadd.s32 40, 1
    %s474 = scalar_lea.vmem [#allocation2], %s473
    %475 = vst [vmem:[%s474] sm:$0x1] %v472
    %s476 = sld [smem:[#allocation4 + $0x282]]
    %s477 = scalar_lea.vmem [#allocation5], %s476
    %v478 = vld [vmem:[%s477] sm:$0x1]
    %s479 = sadd.s32 40, 2
    %s480 = scalar_lea.vmem [#allocation2], %s479
    %481 = vst [vmem:[%s480] sm:$0x1] %v478
    %s482 = sld [smem:[#allocation4 + $0x283]]
    %s483 = scalar_lea.vmem [#allocation5], %s482
    %v484 = vld [vmem:[%s483] sm:$0x1]
    %s485 = sadd.s32 40, 3
    %s486 = scalar_lea.vmem [#allocation2], %s485
    %487 = vst [vmem:[%s486] sm:$0x1] %v484
    %s488 = sld [smem:[#allocation4 + $0x284]]
    %s489 = scalar_lea.vmem [#allocation5], %s488
    %v490 = vld [vmem:[%s489] sm:$0x1]
    %s491 = sadd.s32 40, 4
    %s492 = scalar_lea.vmem [#allocation2], %s491
    %493 = vst [vmem:[%s492] sm:$0x1] %v490
    %s494 = sld [smem:[#allocation4 + $0x285]]
    %s495 = scalar_lea.vmem [#allocation5], %s494
    %v496 = vld [vmem:[%s495] sm:$0x1]
    %s497 = sadd.s32 40, 5
    %s498 = scalar_lea.vmem [#allocation2], %s497
    %499 = vst [vmem:[%s498] sm:$0x1] %v496
    %s500 = sld [smem:[#allocation4 + $0x286]]
    %s501 = scalar_lea.vmem [#allocation5], %s500
    %v502 = vld [vmem:[%s501] sm:$0x1]
    %s503 = sadd.s32 40, 6
    %s504 = scalar_lea.vmem [#allocation2], %s503
    %505 = vst [vmem:[%s504] sm:$0x1] %v502
    %s506 = sld [smem:[#allocation4 + $0x287]]
    %s507 = scalar_lea.vmem [#allocation5], %s506
    %v508 = vld [vmem:[%s507] sm:$0x1]
    %s509 = sadd.s32 40, 7
    %s510 = scalar_lea.vmem [#allocation2], %s509
    %511 = vst [vmem:[%s510] sm:$0x1] %v508
    %v512 = vld [vmem:[%s468] sm:$0xff]
    %513 = vmatpush.msra.mxu0 %v109
    %514 = vmatpush.msra.mxu0 %v108
    %515 = vmatpush.msra.mxu0 %v107
    %516 = vmatpush.msra.mxu0 %v106
    %517 = vmatpush.msra.mxu0 %v105
    %518 = vmatpush.msra.mxu0 %v104
    %519 = vmatpush.msra.mxu0 %v103
    %520 = vmatpush.msra.mxu0 %v102
    %521 = vmatpush.msra.mxu0 %v101
    %522 = vmatpush.msra.mxu0 %v100
    %523 = vmatpush.msra.mxu0 %v99
    %524 = vmatpush.msra.mxu0 %v98
    %525 = vmatpush.msra.mxu0 %v97
    %526 = vmatpush.msra.mxu0 %v96
    %527 = vmatpush.msra.mxu0 %v95
    %528 = vmatpush.msra.mxu0 %v94
    %529 = vmatmul.f32.gmra.mxu0 %v463
    %v530 = vpop.f32.mrf.mxu0
    %v531 = vadd.f32 0.0, %v530
    %532 = vdwg.mxu0
    %v533 = vadd.f32 %v512, %v531
    %v534 = vtanh.pop %v533
    %535 = vst [vmem:[%s468] sm:$0xff] %v534
    %s536 = sld [smem:[#allocation4 + $0x300]]
    %s537 = scalar_lea.vmem [#allocation5], %s536
    %v538 = vld [vmem:[%s537] sm:$0x1]
    %s539 = scalar_lea.vmem [#allocation2], 48
    %540 = vst [vmem:[%s539] sm:$0x1] %v538
    %s541 = sld [smem:[#allocation4 + $0x301]]
    %s542 = scalar_lea.vmem [#allocation5], %s541
    %v543 = vld [vmem:[%s542] sm:$0x1]
    %s544 = sadd.s32 48, 1
    %s545 = scalar_lea.vmem [#allocation2], %s544
    %546 = vst [vmem:[%s545] sm:$0x1] %v543
    %s547 = sld [smem:[#allocation4 + $0x302]]
    %s548 = scalar_lea.vmem [#allocation5], %s547
    %v549 = vld [vmem:[%s548] sm:$0x1]
    %s550 = sadd.s32 48, 2
    %s551 = scalar_lea.vmem [#allocation2], %s550
    %552 = vst [vmem:[%s551] sm:$0x1] %v549
    %s553 = sld [smem:[#allocation4 + $0x303]]
    %s554 = scalar_lea.vmem [#allocation5], %s553
    %v555 = vld [vmem:[%s554] sm:$0x1]
    %s556 = sadd.s32 48, 3
    %s557 = scalar_lea.vmem [#allocation2], %s556
    %558 = vst [vmem:[%s557] sm:$0x1] %v555
    %s559 = sld [smem:[#allocation4 + $0x304]]
    %s560 = scalar_lea.vmem [#allocation5], %s559
    %v561 = vld [vmem:[%s560] sm:$0x1]
    %s562 = sadd.s32 48, 4
    %s563 = scalar_lea.vmem [#allocation2], %s562
    %564 = vst [vmem:[%s563] sm:$0x1] %v561
    %s565 = sld [smem:[#allocation4 + $0x305]]
    %s566 = scalar_lea.vmem [#allocation5], %s565
    %v567 = vld [vmem:[%s566] sm:$0x1]
    %s568 = sadd.s32 48, 5
    %s569 = scalar_lea.vmem [#allocation2], %s568
    %570 = vst [vmem:[%s569] sm:$0x1] %v567
    %s571 = sld [smem:[#allocation4 + $0x306]]
    %s572 = scalar_lea.vmem [#allocation5], %s571
    %v573 = vld [vmem:[%s572] sm:$0x1]
    %s574 = sadd.s32 48, 6
    %s575 = scalar_lea.vmem [#allocation2], %s574
    %576 = vst [vmem:[%s575] sm:$0x1] %v573
    %s577 = sld [smem:[#allocation4 + $0x307]]
    %s578 = scalar_lea.vmem [#allocation5], %s577
    %v579 = vld [vmem:[%s578] sm:$0x1]
    %s580 = sadd.s32 48, 7
    %s581 = scalar_lea.vmem [#allocation2], %s580
    %582 = vst [vmem:[%s581] sm:$0x1] %v579
    %v583 = vld [vmem:[%s539] sm:$0xff]
    %584 = vmatpush.msra.mxu0 %v109
    %585 = vmatpush.msra.mxu0 %v108
    %586 = vmatpush.msra.mxu0 %v107
    %587 = vmatpush.msra.mxu0 %v106
    %588 = vmatpush.msra.mxu0 %v105
    %589 = vmatpush.msra.mxu0 %v104
    %590 = vmatpush.msra.mxu0 %v103
    %591 = vmatpush.msra.mxu0 %v102
    %592 = vmatpush.msra.mxu0 %v101
    %593 = vmatpush.msra.mxu0 %v100
    %594 = vmatpush.msra.mxu0 %v99
    %595 = vmatpush.msra.mxu0 %v98
    %596 = vmatpush.msra.mxu0 %v97
    %597 = vmatpush.msra.mxu0 %v96
    %598 = vmatpush.msra.mxu0 %v95
    %599 = vmatpush.msra.mxu0 %v94
    %600 = vmatmul.f32.gmra.mxu0 %v534
    %v601 = vpop.f32.mrf.mxu0
    %v602 = vadd.f32 0.0, %v601
    %603 = vdwg.mxu0
    %v604 = vadd.f32 %v583, %v602
    %v605 = vtanh.pop %v604
    %606 = vst [vmem:[%s539] sm:$0xff] %v605
    %s607 = sld [smem:[#allocation4 + $0x380]]
    %s608 = scalar_lea.vmem [#allocation5], %s607
    %v609 = vld [vmem:[%s608] sm:$0x1]
    %s610 = scalar_lea.vmem [#allocation2], 56
    %611 = vst [vmem:[%s610] sm:$0x1] %v609
    %s612 = sld [smem:[#allocation4 + $0x381]]
    %s613 = scalar_lea.vmem [#allocation5], %s612
    %v614 = vld [vmem:[%s613] sm:$0x1]
    %s615 = sadd.s32 56, 1
    %s616 = scalar_lea.vmem [#allocation2], %s615
    %617 = vst [vmem:[%s616] sm:$0x1] %v614
    %s618 = sld [smem:[#allocation4 + $0x382]]
    %s619 = scalar_lea.vmem [#allocation5], %s618
    %v620 = vld [vmem:[%s619] sm:$0x1]
    %s621 = sadd.s32 56, 2
    %s622 = scalar_lea.vmem [#allocation2], %s621
    %623 = vst [vmem:[%s622] sm:$0x1] %v620
    %s624 = sld [smem:[#allocation4 + $0x383]]
    %s625 = scalar_lea.vmem [#allocation5], %s624
    %v626 = vld [vmem:[%s625] sm:$0x1]
    %s627 = sadd.s32 56, 3
    %s628 = scalar_lea.vmem [#allocation2], %s627
    %629 = vst [vmem:[%s628] sm:$0x1] %v626
    %s630 = sld [smem:[#allocation4 + $0x384]]
    %s631 = scalar_lea.vmem [#allocation5], %s630
    %v632 = vld [vmem:[%s631] sm:$0x1]
    %s633 = sadd.s32 56, 4
    %s634 = scalar_lea.vmem [#allocation2], %s633
    %635 = vst [vmem:[%s634] sm:$0x1] %v632
    %s636 = sld [smem:[#allocation4 + $0x385]]
    %s637 = scalar_lea.vmem [#allocation5], %s636
    %v638 = vld [vmem:[%s637] sm:$0x1]
    %s639 = sadd.s32 56, 5
    %s640 = scalar_lea.vmem [#allocation2], %s639
    %641 = vst [vmem:[%s640] sm:$0x1] %v638
    %s642 = sld [smem:[#allocation4 + $0x386]]
    %s643 = scalar_lea.vmem [#allocation5], %s642
    %v644 = vld [vmem:[%s643] sm:$0x1]
    %s645 = sadd.s32 56, 6
    %s646 = scalar_lea.vmem [#allocation2], %s645
    %647 = vst [vmem:[%s646] sm:$0x1] %v644
    %s648 = sld [smem:[#allocation4 + $0x387]]
    %s649 = scalar_lea.vmem [#allocation5], %s648
    %v650 = vld [vmem:[%s649] sm:$0x1]
    %s651 = sadd.s32 56, 7
    %s652 = scalar_lea.vmem [#allocation2], %s651
    %653 = vst [vmem:[%s652] sm:$0x1] %v650
    %v654 = vld [vmem:[%s610] sm:$0xff]
    %655 = vmatpush.msra.mxu0 %v109
    %656 = vmatpush.msra.mxu0 %v108
    %657 = vmatpush.msra.mxu0 %v107
    %658 = vmatpush.msra.mxu0 %v106
    %659 = vmatpush.msra.mxu0 %v105
    %660 = vmatpush.msra.mxu0 %v104
    %661 = vmatpush.msra.mxu0 %v103
    %662 = vmatpush.msra.mxu0 %v102
    %663 = vmatpush.msra.mxu0 %v101
    %664 = vmatpush.msra.mxu0 %v100
    %665 = vmatpush.msra.mxu0 %v99
    %666 = vmatpush.msra.mxu0 %v98
    %667 = vmatpush.msra.mxu0 %v97
    %668 = vmatpush.msra.mxu0 %v96
    %669 = vmatpush.msra.mxu0 %v95
    %670 = vmatpush.msra.mxu0 %v94
    %671 = vmatmul.f32.gmra.mxu0 %v605
    %v672 = vpop.f32.mrf.mxu0
    %v673 = vadd.f32 0.0, %v672
    %674 = vdwg.mxu0
    %v675 = vadd.f32 %v654, %v673
    %v676 = vtanh.pop %v675
    %677 = vst [vmem:[%s610] sm:$0xff] %v676
    %678 = vst [vmem:[#allocation14] sm:$0xff] %v676
    %v679 = vld [vmem:[#allocation2] sm:$0xff]
    %v680 = vld [vmem:[#allocation2 + $0x8] sm:$0xff]
    %v681 = vld [vmem:[#allocation2 + $0x10] sm:$0xff]
    %v682 = vld [vmem:[#allocation2 + $0x18] sm:$0xff]
    %v683 = vld [vmem:[#allocation2 + $0x20] sm:$0xff]
    %v684 = vld [vmem:[#allocation2 + $0x28] sm:$0xff]
    %v685 = vld [vmem:[#allocation2 + $0x30] sm:$0xff]
    %v686 = vld [vmem:[#allocation2 + $0x38] sm:$0xff]
    %v687 = vld [vmem:[#allocation11] sm:$0xff]
    %v688 = vld [vmem:[#allocation11 + $0x8] sm:$0xff]
    %v689 = vld [vmem:[#allocation11 + $0x10] sm:$0xff]
    %v690 = vld [vmem:[#allocation11 + $0x18] sm:$0xff]
    %v691 = vld [vmem:[#allocation11 + $0x20] sm:$0xff]
    %v692 = vld [vmem:[#allocation11 + $0x28] sm:$0xff]
    %v693 = vld [vmem:[#allocation11 + $0x30] sm:$0xff]
    %v694 = vld [vmem:[#allocation11 + $0x38] sm:$0xff]
    %v695 = vld [vmem:[#allocation11 + $0x40] sm:$0xff]
    %v696 = vld [vmem:[#allocation11 + $0x48] sm:$0xff]
    %v697 = vld [vmem:[#allocation11 + $0x50] sm:$0xff]
    %v698 = vld [vmem:[#allocation11 + $0x58] sm:$0xff]
    %v699 = vld [vmem:[#allocation11 + $0x60] sm:$0xff]
    %v700 = vld [vmem:[#allocation11 + $0x68] sm:$0xff]
    %v701 = vld [vmem:[#allocation11 + $0x70] sm:$0xff]
    %v702 = vld [vmem:[#allocation11 + $0x78] sm:$0xff]
    %v703 = vld [vmem:[%s5] sm:$0x1]
    %v705 = vperm.slane %v703, 0
    %707 = vmatpush.msra.mxu0 %v702
    %708 = vmatpush.msra.mxu0 %v701
    %709 = vmatpush.msra.mxu0 %v700
    %710 = vmatpush.msra.mxu0 %v699
    %711 = vmatpush.msra.mxu0 %v698
    %712 = vmatpush.msra.mxu0 %v697
    %713 = vmatpush.msra.mxu0 %v696
    %714 = vmatpush.msra.mxu0 %v695
    %715 = vmatpush.msra.mxu0 %v694
    %716 = vmatpush.msra.mxu0 %v693
    %717 = vmatpush.msra.mxu0 %v692
    %718 = vmatpush.msra.mxu0 %v691
    %719 = vmatpush.msra.mxu0 %v690
    %720 = vmatpush.msra.mxu0 %v689
    %721 = vmatpush.msra.mxu0 %v688
    %722 = vmatpush.msra.mxu0 %v687
    %723 = vmatmul.f32.gmra.mxu0 %v679
    %v724 = vpop.f32.mrf.mxu0
    %v725 = vadd.f32 %v705, %v724
    %726 = vmatmul.f32.gmra.mxu0 %v680
    %v727 = vpop.f32.mrf.mxu0
    %v728 = vadd.f32 %v705, %v727
    %729 = vmatmul.f32.gmra.mxu0 %v681
    %v730 = vpop.f32.mrf.mxu0
    %v731 = vadd.f32 %v705, %v730
    %732 = vmatmul.f32.gmra.mxu0 %v682
    %v733 = vpop.f32.mrf.mxu0
    %v734 = vadd.f32 %v705, %v733
    %735 = vmatmul.f32.gmra.mxu0 %v683
    %v736 = vpop.f32.mrf.mxu0
    %v737 = vadd.f32 %v705, %v736
    %738 = vmatmul.f32.gmra.mxu0 %v684
    %v739 = vpop.f32.mrf.mxu0
    %v740 = vadd.f32 %v705, %v739
    %741 = vmatmul.f32.gmra.mxu0 %v685
    %v742 = vpop.f32.mrf.mxu0
    %v743 = vadd.f32 %v705, %v742
    %744 = vmatmul.f32.gmra.mxu0 %v686
    %v745 = vpop.f32.mrf.mxu0
    %v746 = vadd.f32 %v705, %v745
    %747 = vdwg.mxu0
    %748 = vst [vmem:[#allocation13] sm:$0xff] %v725
    %749 = vst [vmem:[#allocation13 + $0x8] sm:$0xff] %v728
    %750 = vst [vmem:[#allocation13 + $0x10] sm:$0xff] %v731
    %751 = vst [vmem:[#allocation13 + $0x18] sm:$0xff] %v734
    %752 = vst [vmem:[#allocation13 + $0x20] sm:$0xff] %v737
    %753 = vst [vmem:[#allocation13 + $0x28] sm:$0xff] %v740
    %754 = vst [vmem:[#allocation13 + $0x30] sm:$0xff] %v743
    %755 = vst [vmem:[#allocation13 + $0x38] sm:$0xff] %v746
    // Predicated region
    $region38: #{tpu_custom_call.1} parent=1 // pred_check
      _
    $region39: #{tpu_custom_call.1} parent=1 // pred_check_branch
      %757 = sbr.rel (0) target = $region41
    $region40: #{tpu_custom_call.1} parent=1 // pred_region
      %759 = vsyncadd [#allocation7], 0
      %s760 = sshll.u32 [#allocation13], 4
      %s761 = int_to_ptr.vmem [resolvable:$true] %s760
      %s762 = sshll.u32 %s6, 4
      %s763 = int_to_ptr.hbm [resolvable:$true] %s762
      %768 = dma.vmem_to_hbm [thread:$0]  %s761, 1024, %s763, [#allocation7], 128, 128, 8
    $region41: #{tpu_custom_call.1} parent=1 // pred_fallthru
      _
    // Predicated region
    $region42: #{tpu_custom_call.1} parent=1 // pred_check
      _
    $region43: #{tpu_custom_call.1} parent=1 // pred_check_branch
      %770 = sbr.rel (0) target = $region45
    $region44: #{tpu_custom_call.1} parent=1 // pred_region
      %772 = vsyncadd [#allocation15], 0
      %s774 = sshll.u32 [#allocation14], 4
      %s775 = int_to_ptr.vmem [resolvable:$true] %s774
      %s776 = sshll.u32 %s7, 4
      %s777 = int_to_ptr.hbm [resolvable:$true] %s776
      %779 = dma.vmem_to_hbm [thread:$0]  %s775, 128, %s777, [#allocation15]
    $region45: #{tpu_custom_call.1} parent=1 // pred_fallthru
      _
    // Predicated region
    $region46: #{tpu_custom_call.1} parent=1 // pred_check
      _
    $region47: #{tpu_custom_call.1} parent=1 // pred_check_branch
      %781 = sbr.rel (0) target = $region49
    $region48: #{tpu_custom_call.1} parent=1 // pred_region
      %783 = dma.done [#allocation7], 1024
    $region49: #{tpu_custom_call.1} parent=1 // pred_fallthru
      _
    // Predicated region
    $region50: #{tpu_custom_call.1} parent=1 // pred_check
      _
    $region51: #{tpu_custom_call.1} parent=1 // pred_check_branch
      %785 = sbr.rel (0) target = $region53
    $region52: #{tpu_custom_call.1} parent=1 // pred_region
      %787 = dma.done [#allocation15], 128
    $region53: #{tpu_custom_call.1} parent=1 // pred_fallthru
      _
    %788 = vsyncpa [#allocation6], 1
    %789 = vsyncpa [#allocation9], 1
    %790 = vsyncpa [#allocation12], 1
    %791 = vsyncpa [#allocation7], 1
    %792 = vsyncpa [#allocation15], 1

</llo_original>
